<compile_context>
chip_gen: v6e
topology: v6e:2x2x1
jax: 0.10.0
libtpu: 0.0.40
codegen_flags: <defaults>
</compile_context>

<pallas_src>
import jax
import jax.numpy as jnp
import numpy as np
from jax import lax
from jax.experimental import pallas as pl
from jax.experimental.pallas import tpu as pltpu

CLIP_DIM = 512      # get_clip_dim('ViT-B/32')
N_EMBED = 128       # n_embedding (lane-dense output width)
EPS = 1e-12         # torch.nn.functional.normalize default eps


def _clip_head_kernel(x_ref, w_ref, b_ref, o_ref):
    x = x_ref[...]
    xf = x.astype(jnp.float32)                       # `.float()` semantics
    # F.normalize(x, dim=-1): scale = 1 / max(||x||, eps).
    # rsqrt(max(sumsq, eps^2)) == 1/max(||x||, eps); rsqrt runs on the EUP
    # (separate bundle slot, free vs. a VPU divide).
    sumsq = jnp.sum(xf * xf, axis=-1, keepdims=True)
    inv = lax.rsqrt(jnp.maximum(sumsq, EPS * EPS))
    # PostProcessor 'project' (GPT-2 Conv1D): y = x @ W + b on the MXU.
    if x_ref.dtype == jnp.float32:
        # True-f32 matmul for torch parity; extra passes are hidden under HBM.
        y = jnp.dot(xf, w_ref[...], preferred_element_type=jnp.float32,
                    precision=lax.Precision.HIGHEST)
    else:
        # bf16 embeddings: MXU consumes bf16 natively, skip the (block_b, 512)
        # f32 upcast materialization (documented deviation from `.float()`).
        y = jnp.dot(x, w_ref[...].astype(x_ref.dtype),
                    preferred_element_type=jnp.float32)
    # Fold the per-row normalization scale onto the 128-wide result.
    o_ref[...] = y * inv + b_ref[...]


def _pick_block_b(B, max_block=2048):
    """Row tile: <= max_block (safe under v5e's 16 MiB default scoped VMEM in
    f32; pass block_b=4096 explicitly on v6e/v7x if desired), a multiple of 8
    (sublane alignment), and — when B is large enough to split — an even number
    of grid steps so v7x's two TensorCores stay balanced.  The ragged tail is
    handled by the cdiv grid + padded last block."""
    if B <= 128:
        return B                      # full-extent block dim is always legal
    n_blocks = max(2, pl.cdiv(B, max_block))   # >=2 tiles: v7x 2-TC parallelism
    if n_blocks % 2:
        n_blocks += 1                           # even grid: balanced TC split
    block = pl.cdiv(B, n_blocks)
    block = ((block + 7) // 8) * 8              # sublane-align
    return min(max_block, block)


def clip_image_encoder_forward(x, w, b, *, block_b=None):
    """normalize=True, embed_type='project' head of CLIPImageEncoder."""
    B, D = x.shape
    assert D == CLIP_DIM
    assert w.shape == (CLIP_DIM, N_EMBED) and b.shape == (1, N_EMBED)
    if block_b is None:
        block_b = _pick_block_b(B)
    grid_b = pl.cdiv(B, block_b)

    cost = pl.CostEstimate(
        flops=2 * B * CLIP_DIM * N_EMBED + 3 * B * CLIP_DIM + 2 * B * N_EMBED,
        transcendentals=B,
        bytes_accessed=(B * CLIP_DIM * x.dtype.itemsize
                        + CLIP_DIM * N_EMBED * 4 + N_EMBED * 4
                        + B * N_EMBED * 4),
    )

    return pl.pallas_call(
        _clip_head_kernel,
        out_shape=jax.ShapeDtypeStruct((B, N_EMBED), jnp.float32),
        grid_spec=pltpu.PrefetchScalarGridSpec(
            num_scalar_prefetch=0,
            grid=(grid_b,),
            in_specs=[
                pl.BlockSpec((block_b, CLIP_DIM), lambda i: (i, 0)),   # x tile
                pl.BlockSpec((CLIP_DIM, N_EMBED), lambda i: (0, 0)),   # W (resident)
                pl.BlockSpec((1, N_EMBED), lambda i: (0, 0)),          # bias
            ],
            out_specs=pl.BlockSpec((block_b, N_EMBED), lambda i: (i, 0)),
        ),
        compiler_params=pltpu.CompilerParams(
            # Row axis is independent -> shard across TensorCores on v7x.
            dimension_semantics=("parallel",)),
        cost_estimate=cost,
    )(x, w, b)


if __name__ == "__main__":
    key = jax.random.PRNGKey(0)
    kx, kw = jax.random.split(key)

    def reference(x, w, b):
        xn = x / jnp.maximum(jnp.linalg.norm(x, axis=-1, keepdims=True), EPS)
        return xn @ w + b

    # Deterministic Conv1D params: weight ~ N(0, 0.02), bias = zeros
    # (matches transformers Conv1D(n_embedding, clip_dim) init shapes).
    w = 0.02 * jax.random.normal(kw, (CLIP_DIM, N_EMBED), dtype=jnp.float32)
    b = jnp.zeros((1, N_EMBED), dtype=jnp.float32)

    # (a) small batch -> single full-extent block (2-D passthrough path).
    B = 16
    x = jax.random.normal(kx, (B, CLIP_DIM), dtype=jnp.float32)
    out = jax.block_until_ready(clip_image_encoder_forward(x, w, b))
    assert out.shape == (B, N_EMBED) and out.dtype == jnp.float32
    np.testing.assert_allclose(np.asarray(out), np.asarray(reference(x, w, b)),
                               rtol=1e-5, atol=1e-5)

    # (b) ragged batch exercising the cdiv grid with a padded last block.
    B2 = 40
    x2 = jax.random.normal(kx, (B2, CLIP_DIM), dtype=jnp.float32)
    out2 = jax.block_until_ready(
        clip_image_encoder_forward(x2, w, b, block_b=16))   # grid=3, tail=8 rows
    np.testing.assert_allclose(np.asarray(out2), np.asarray(reference(x2, w, b)),
                               rtol=1e-5, atol=1e-5)

    print("KERNEL_OK")
</pallas_src>

<mosaic_0001>
module attributes {stable_mosaic.version = 11 : i64} {
  func.func @_clip_head_kernel(%arg0: i32, %arg1: memref<16x512xf32, #tpu.memory_space<vmem>>, %arg2: memref<512x128xf32, #tpu.memory_space<vmem>>, %arg3: memref<1x128xf32, #tpu.memory_space<vmem>>, %arg4: memref<16x128xf32, #tpu.memory_space<vmem>>) attributes {dimension_semantics = [#tpu.dimension_semantics<parallel>], iteration_bounds = array<i64: 1>, scalar_prefetch = 0 : i64, scratch_operands = 0 : i64, tpu.core_type = #tpu.core_type<tc>, window_params = [{transform_indices = @transform_0, window_bounds = array<i64: 16, 512>}, {pipeline_mode = #tpu.pipeline_mode<synchronous>, transform_indices = @transform_1, window_bounds = array<i64: 512, 128>}, {pipeline_mode = #tpu.pipeline_mode<synchronous>, transform_indices = @transform_2, window_bounds = array<i64: 1, 128>}, {transform_indices = @transform_3, window_bounds = array<i64: 16, 128>}]} {
    %c0 = arith.constant 0 : index
    %c0_0 = arith.constant 0 : index
    %0 = vector.load %arg1[%c0, %c0_0] : memref<16x512xf32, #tpu.memory_space<vmem>>, vector<16x512xf32>
    %1 = arith.mulf %0, %0 : vector<16x512xf32>
    %cst = arith.constant dense<0.000000e+00> : vector<16xf32>
    %2 = vector.multi_reduction <add>, %1, %cst [1] : vector<16x512xf32> to vector<16xf32>
    %3 = vector.shape_cast %2 : vector<16xf32> to vector<16x1xf32>
    %cst_1 = arith.constant 1.000000e-24 : f32
    %4 = vector.broadcast %cst_1 : f32 to vector<16x1xf32>
    %5 = arith.maximumf %3, %4 : vector<16x1xf32>
    %6 = math.rsqrt %5 : vector<16x1xf32>
    %c0_2 = arith.constant 0 : index
    %c0_3 = arith.constant 0 : index
    %7 = vector.load %arg2[%c0_2, %c0_3] : memref<512x128xf32, #tpu.memory_space<vmem>>, vector<512x128xf32>
    %cst_4 = arith.constant dense<0.000000e+00> : vector<16x128xf32>
    %8 = tpu.matmul %0, %7, %cst_4 {dimension_numbers = #tpu.dot_dimension_numbers<[1], [0], [0], [1], [0, 0, 1, 1], [], []>, precision = #tpu.contract_precision<fp32>} : vector<16x512xf32>, vector<512x128xf32>, vector<16x128xf32> -> vector<16x128xf32>
    %9 = vector.broadcast %6 : vector<16x1xf32> to vector<16x128xf32>
    %10 = arith.mulf %8, %9 : vector<16x128xf32>
    %c0_5 = arith.constant 0 : index
    %c0_6 = arith.constant 0 : index
    %11 = vector.load %arg3[%c0_5, %c0_6] : memref<1x128xf32, #tpu.memory_space<vmem>>, vector<1x128xf32>
    %12 = vector.broadcast %11 : vector<1x128xf32> to vector<16x128xf32>
    %13 = arith.addf %10, %12 : vector<16x128xf32>
    %c0_7 = arith.constant 0 : index
    %c0_8 = arith.constant 0 : index
    %14 = vector.load %arg4[%c0_7, %c0_8] : memref<16x128xf32, #tpu.memory_space<vmem>>, vector<16x128xf32>
    tpu.vector_store %arg4[%c0_7, %c0_8], %13 {strides = array<i32>} : memref<16x128xf32, #tpu.memory_space<vmem>>, vector<16x128xf32>,
    return
  }
  func.func @transform_0(%arg0: i32) -> (i32, i32) {
    %c0_i32 = arith.constant 0 : i32
    %c0_i32_0 = arith.constant 0 : i32
    return %arg0, %c0_i32 : i32, i32
  }
  func.func @transform_1(%arg0: i32) -> (i32, i32) {
    %c0_i32 = arith.constant 0 : i32
    %c0_i32_0 = arith.constant 0 : i32
    %c0_i32_1 = arith.constant 0 : i32
    return %c0_i32, %c0_i32_0 : i32, i32
  }
  func.func @transform_2(%arg0: i32) -> (i32, i32) {
    %c0_i32 = arith.constant 0 : i32
    %c0_i32_0 = arith.constant 0 : i32
    %c0_i32_1 = arith.constant 0 : i32
    return %c0_i32, %c0_i32_0 : i32, i32
  }
  func.func @transform_3(%arg0: i32) -> (i32, i32) {
    %c0_i32 = arith.constant 0 : i32
    %c0_i32_0 = arith.constant 0 : i32
    return %arg0, %c0_i32 : i32, i32
  }
}

</mosaic_0001>

<llo_original>
// kernel: tpu_custom_call.1
$region0: #{tpu_custom_call.1}
  #allocation0 [shape = 'u32[]', space=smem, size = 0x4, offset = 0x4, fixed_abs, tag = 'smem constant byte address 0x4 - core index']
  #allocation1 [shape = 'u32[144,128]{1,0:T(1,128)}', space=vmem, size = 0x12000, scoped, tag = 'internal scratch']
  %s0 = inlined_call_operand.hbm [shape: f32[16,512], index: 0, kind: input, shape index: {}]
  %s1 = inlined_call_operand.hbm [shape: f32[512,128], index: 1, kind: input, shape index: {}]
  %s2 = inlined_call_operand.vmem [shape: f32[1,128], index: 2, kind: input, shape index: {}]
  %s3 = inlined_call_operand.hbm [shape: f32[16,128], index: 3, kind: output, shape index: {}]
  %s4 = sld [smem:[#allocation0]]
  $region30: #{tpu_custom_call.1} parent=0
    _
  %s6 = ssub.s32 1, %s4
  %s7 = scalar_select 0, %s6, %s4
  $region1: #{tpu_custom_call.1} parent=0
    #allocation2 [shape = 'u8[32768]{0}', space=vmem, size = 0x8000, scoped, tag = 'input window, operand 0, single buffered']
    #allocation3 [shape = 's32[1]{0}', space=sflag, size = 0x4, scoped, tag = 'scoped memory for tpu_custom_call.1']
    #allocation4 [shape = 's32[1]{0}', space=sflag, size = 0x4, scoped, tag = 'scoped memory for tpu_custom_call.1']
    #allocation5 [shape = 'u8[262144]{0}', space=vmem, size = 0x40000, scoped, tag = 'input window, operand 1, single buffered']
    #allocation6 [shape = 's32[1]{0}', space=sflag, size = 0x4, scoped, tag = 'scoped memory for tpu_custom_call.1']
    #allocation7 [shape = 'u8[8192]{0}', space=vmem, size = 0x2000, scoped, tag = 'output window, operand 0, single buffered']
    %8 = vsyncpa [#allocation3], 0
    %9 = vsyncpa [#allocation6], 0
    %10 = vsyncpa [#allocation4], 0
    // Predicated region
    $region2: #{tpu_custom_call.1} parent=1 // pred_check
      _
    $region3: #{tpu_custom_call.1} parent=1 // pred_check_branch
      %12 = sbr.rel (0) target = $region5
    $region4: #{tpu_custom_call.1} parent=1 // pred_region
      %s14 = ssub.s32 1024, 1024
      %15 = vsyncadd [#allocation3], %s14
      %s16 = sshll.u32 [#allocation2], 4
      %s17 = int_to_ptr.vmem [resolvable:$true] %s16
      %22 = dma.hbm_to_vmem [thread:$0]  %s0, 1024, %s17, [#allocation3], 512, 512, 32
    $region5: #{tpu_custom_call.1} parent=1 // pred_fallthru
      _
    // Predicated region
    $region6: #{tpu_custom_call.1} parent=1 // pred_check
      _
    $region7: #{tpu_custom_call.1} parent=1 // pred_check_branch
      %24 = sbr.rel (0) target = $region9
    $region8: #{tpu_custom_call.1} parent=1 // pred_region
      %s26 = ssub.s32 8192, 8192
      %27 = vsyncadd [#allocation6], %s26
      %s28 = sshll.u32 [#allocation5], 4
      %s29 = int_to_ptr.vmem [resolvable:$true] %s28
      %34 = dma.hbm_to_vmem [thread:$0]  %s1, 8192, %s29, [#allocation6], 128, 128, 8
    $region9: #{tpu_custom_call.1} parent=1 // pred_fallthru
      _
    // Predicated region
    $region10: #{tpu_custom_call.1} parent=1 // pred_check
      _
    $region11: #{tpu_custom_call.1} parent=1 // pred_check_branch
      %36 = sbr.rel (0) target = $region13
    $region12: #{tpu_custom_call.1} parent=1 // pred_region
      _
    $region13: #{tpu_custom_call.1} parent=1 // pred_fallthru
      _
    // Predicated region
    $region14: #{tpu_custom_call.1} parent=1 // pred_check
      _
    $region15: #{tpu_custom_call.1} parent=1 // pred_check_branch
      %38 = sbr.rel (0) target = $region17
    $region16: #{tpu_custom_call.1} parent=1 // pred_region
      %39 = dma.done [#allocation3], 1024
    $region17: #{tpu_custom_call.1} parent=1 // pred_fallthru
      _
    // Predicated region
    $region18: #{tpu_custom_call.1} parent=1 // pred_check
      _
    $region19: #{tpu_custom_call.1} parent=1 // pred_check_branch
      %41 = sbr.rel (0) target = $region21
    $region20: #{tpu_custom_call.1} parent=1 // pred_region
      %42 = dma.done [#allocation6], 8192
    $region21: #{tpu_custom_call.1} parent=1 // pred_fallthru
      _
    %v43 = vld [vmem:[#allocation2] sm:$0xff]
    %v44 = vld [vmem:[#allocation2 + $0x8] sm:$0xff]
    %v45 = vld [vmem:[#allocation2 + $0x10] sm:$0xff]
    %v46 = vld [vmem:[#allocation2 + $0x18] sm:$0xff]
    %v47 = vld [vmem:[#allocation2 + $0x20] sm:$0xff]
    %v48 = vld [vmem:[#allocation2 + $0x28] sm:$0xff]
    %v49 = vld [vmem:[#allocation2 + $0x30] sm:$0xff]
    %v50 = vld [vmem:[#allocation2 + $0x38] sm:$0xff]
    %v51 = vmul.f32 %v43, %v43
    %v52 = vmul.f32 %v44, %v44
    %v53 = vmul.f32 %v45, %v45
    %v54 = vmul.f32 %v46, %v46
    %v55 = vmul.f32 %v47, %v47
    %v56 = vmul.f32 %v48, %v48
    %v57 = vmul.f32 %v49, %v49
    %v58 = vmul.f32 %v50, %v50
    %v59 = vadd.f32 %v51, %v52
    %v60 = vadd.f32 %v59, %v53
    %v61 = vadd.f32 %v60, %v54
    %62 = vadd.xlane.f32.xlu0 %v61
    %v63 = vpop.xlane.xlu0 %62
    %v64 = vadd.f32 %v55, %v56
    %v65 = vadd.f32 %v64, %v57
    %v66 = vadd.f32 %v65, %v58
    %67 = vadd.xlane.f32.xlu0 %v66
    %v68 = vpop.xlane.xlu0 %67
    %v69 = vmax.f32 %v63, 1e-24
    %v70 = vmax.f32 %v68, 1e-24
    %v71 = vrsqrt.pop %v69
    %v72 = vrsqrt.pop %v70
    %v73 = vld [vmem:[#allocation5] sm:$0xff]
    %v74 = vld [vmem:[#allocation5 + $0x8] sm:$0xff]
    %v75 = vld [vmem:[#allocation5 + $0x10] sm:$0xff]
    %v76 = vld [vmem:[#allocation5 + $0x18] sm:$0xff]
    %v77 = vld [vmem:[#allocation5 + $0x20] sm:$0xff]
    %v78 = vld [vmem:[#allocation5 + $0x28] sm:$0xff]
    %v79 = vld [vmem:[#allocation5 + $0x30] sm:$0xff]
    %v80 = vld [vmem:[#allocation5 + $0x38] sm:$0xff]
    %v81 = vld [vmem:[#allocation5 + $0x40] sm:$0xff]
    %v82 = vld [vmem:[#allocation5 + $0x48] sm:$0xff]
    %v83 = vld [vmem:[#allocation5 + $0x50] sm:$0xff]
    %v84 = vld [vmem:[#allocation5 + $0x58] sm:$0xff]
    %v85 = vld [vmem:[#allocation5 + $0x60] sm:$0xff]
    %v86 = vld [vmem:[#allocation5 + $0x68] sm:$0xff]
    %v87 = vld [vmem:[#allocation5 + $0x70] sm:$0xff]
    %v88 = vld [vmem:[#allocation5 + $0x78] sm:$0xff]
    %v89 = vld [vmem:[#allocation5 + $0x80] sm:$0xff]
    %v90 = vld [vmem:[#allocation5 + $0x88] sm:$0xff]
    %v91 = vld [vmem:[#allocation5 + $0x90] sm:$0xff]
    %v92 = vld [vmem:[#allocation5 + $0x98] sm:$0xff]
    %v93 = vld [vmem:[#allocation5 + $0xa0] sm:$0xff]
    %v94 = vld [vmem:[#allocation5 + $0xa8] sm:$0xff]
    %v95 = vld [vmem:[#allocation5 + $0xb0] sm:$0xff]
    %v96 = vld [vmem:[#allocation5 + $0xb8] sm:$0xff]
    %v97 = vld [vmem:[#allocation5 + $0xc0] sm:$0xff]
    %v98 = vld [vmem:[#allocation5 + $0xc8] sm:$0xff]
    %v99 = vld [vmem:[#allocation5 + $0xd0] sm:$0xff]
    %v100 = vld [vmem:[#allocation5 + $0xd8] sm:$0xff]
    %v101 = vld [vmem:[#allocation5 + $0xe0] sm:$0xff]
    %v102 = vld [vmem:[#allocation5 + $0xe8] sm:$0xff]
    %v103 = vld [vmem:[#allocation5 + $0xf0] sm:$0xff]
    %v104 = vld [vmem:[#allocation5 + $0xf8] sm:$0xff]
    %v105 = vld [vmem:[#allocation5 + $0x100] sm:$0xff]
    %v106 = vld [vmem:[#allocation5 + $0x108] sm:$0xff]
    %v107 = vld [vmem:[#allocation5 + $0x110] sm:$0xff]
    %v108 = vld [vmem:[#allocation5 + $0x118] sm:$0xff]
    %v109 = vld [vmem:[#allocation5 + $0x120] sm:$0xff]
    %v110 = vld [vmem:[#allocation5 + $0x128] sm:$0xff]
    %v111 = vld [vmem:[#allocation5 + $0x130] sm:$0xff]
    %v112 = vld [vmem:[#allocation5 + $0x138] sm:$0xff]
    %v113 = vld [vmem:[#allocation5 + $0x140] sm:$0xff]
    %v114 = vld [vmem:[#allocation5 + $0x148] sm:$0xff]
    %v115 = vld [vmem:[#allocation5 + $0x150] sm:$0xff]
    %v116 = vld [vmem:[#allocation5 + $0x158] sm:$0xff]
    %v117 = vld [vmem:[#allocation5 + $0x160] sm:$0xff]
    %v118 = vld [vmem:[#allocation5 + $0x168] sm:$0xff]
    %v119 = vld [vmem:[#allocation5 + $0x170] sm:$0xff]
    %v120 = vld [vmem:[#allocation5 + $0x178] sm:$0xff]
    %v121 = vld [vmem:[#allocation5 + $0x180] sm:$0xff]
    %v122 = vld [vmem:[#allocation5 + $0x188] sm:$0xff]
    %v123 = vld [vmem:[#allocation5 + $0x190] sm:$0xff]
    %v124 = vld [vmem:[#allocation5 + $0x198] sm:$0xff]
    %v125 = vld [vmem:[#allocation5 + $0x1a0] sm:$0xff]
    %v126 = vld [vmem:[#allocation5 + $0x1a8] sm:$0xff]
    %v127 = vld [vmem:[#allocation5 + $0x1b0] sm:$0xff]
    %v128 = vld [vmem:[#allocation5 + $0x1b8] sm:$0xff]
    %v129 = vld [vmem:[#allocation5 + $0x1c0] sm:$0xff]
    %v130 = vld [vmem:[#allocation5 + $0x1c8] sm:$0xff]
    %v131 = vld [vmem:[#allocation5 + $0x1d0] sm:$0xff]
    %v132 = vld [vmem:[#allocation5 + $0x1d8] sm:$0xff]
    %v133 = vld [vmem:[#allocation5 + $0x1e0] sm:$0xff]
    %v134 = vld [vmem:[#allocation5 + $0x1e8] sm:$0xff]
    %v135 = vld [vmem:[#allocation5 + $0x1f0] sm:$0xff]
    %v136 = vld [vmem:[#allocation5 + $0x1f8] sm:$0xff]
    %137 = vmatprep.subr.mxu0 0.0
    %v138 = vand.u32 %v88, 4294901760
    %139 = vmatpush1.msra.mxu0 %v138
    %140 = vmatprep.subr.mxu0 0.0
    %v141 = vand.u32 %v87, 4294901760
    %142 = vmatpush1.msra.mxu0 %v141
    %143 = vmatprep.subr.mxu0 0.0
    %v144 = vand.u32 %v86, 4294901760
    %145 = vmatpush1.msra.mxu0 %v144
    %146 = vmatprep.subr.mxu0 0.0
    %v147 = vand.u32 %v85, 4294901760
    %148 = vmatpush1.msra.mxu0 %v147
    %149 = vmatprep.subr.mxu0 0.0
    %v150 = vand.u32 %v84, 4294901760
    %151 = vmatpush1.msra.mxu0 %v150
    %152 = vmatprep.subr.mxu0 0.0
    %v153 = vand.u32 %v83, 4294901760
    %154 = vmatpush1.msra.mxu0 %v153
    %155 = vmatprep.subr.mxu0 0.0
    %v156 = vand.u32 %v82, 4294901760
    %157 = vmatpush1.msra.mxu0 %v156
    %158 = vmatprep.subr.mxu0 0.0
    %v159 = vand.u32 %v81, 4294901760
    %160 = vmatpush1.msra.mxu0 %v159
    %161 = vmatprep.subr.mxu0 0.0
    %v162 = vand.u32 %v80, 4294901760
    %163 = vmatpush1.msra.mxu0 %v162
    %164 = vmatprep.subr.mxu0 0.0
    %v165 = vand.u32 %v79, 4294901760
    %166 = vmatpush1.msra.mxu0 %v165
    %167 = vmatprep.subr.mxu0 0.0
    %v168 = vand.u32 %v78, 4294901760
    %169 = vmatpush1.msra.mxu0 %v168
    %170 = vmatprep.subr.mxu0 0.0
    %v171 = vand.u32 %v77, 4294901760
    %172 = vmatpush1.msra.mxu0 %v171
    %173 = vmatprep.subr.mxu0 0.0
    %v174 = vand.u32 %v76, 4294901760
    %175 = vmatpush1.msra.mxu0 %v174
    %176 = vmatprep.subr.mxu0 0.0
    %v177 = vand.u32 %v75, 4294901760
    %178 = vmatpush1.msra.mxu0 %v177
    %179 = vmatprep.subr.mxu0 0.0
    %v180 = vand.u32 %v74, 4294901760
    %181 = vmatpush1.msra.mxu0 %v180
    %182 = vmatprep.subr.mxu0 0.0
    %v183 = vand.u32 %v73, 4294901760
    %184 = vmatpush1.msra.mxu0 %v183
    %185 = vmatprep.subr.mxu0 0.0
    %v186 = vand.u32 %v104, 4294901760
    %187 = vmatpush2.msra.mxu0 %v186
    %188 = vmatprep.subr.mxu0 0.0
    %v189 = vand.u32 %v103, 4294901760
    %190 = vmatpush2.msra.mxu0 %v189
    %191 = vmatprep.subr.mxu0 0.0
    %v192 = vand.u32 %v102, 4294901760
    %193 = vmatpush2.msra.mxu0 %v192
    %194 = vmatprep.subr.mxu0 0.0
    %v195 = vand.u32 %v101, 4294901760
    %196 = vmatpush2.msra.mxu0 %v195
    %197 = vmatprep.subr.mxu0 0.0
    %v198 = vand.u32 %v100, 4294901760
    %199 = vmatpush2.msra.mxu0 %v198
    %200 = vmatprep.subr.mxu0 0.0
    %v201 = vand.u32 %v99, 4294901760
    %202 = vmatpush2.msra.mxu0 %v201
    %203 = vmatprep.subr.mxu0 0.0
    %v204 = vand.u32 %v98, 4294901760
    %205 = vmatpush2.msra.mxu0 %v204
    %206 = vmatprep.subr.mxu0 0.0
    %v207 = vand.u32 %v97, 4294901760
    %208 = vmatpush2.msra.mxu0 %v207
    %209 = vmatprep.subr.mxu0 0.0
    %v210 = vand.u32 %v96, 4294901760
    %211 = vmatpush2.msra.mxu0 %v210
    %212 = vmatprep.subr.mxu0 0.0
    %v213 = vand.u32 %v95, 4294901760
    %214 = vmatpush2.msra.mxu0 %v213
    %215 = vmatprep.subr.mxu0 0.0
    %v216 = vand.u32 %v94, 4294901760
    %217 = vmatpush2.msra.mxu0 %v216
    %218 = vmatprep.subr.mxu0 0.0
    %v219 = vand.u32 %v93, 4294901760
    %220 = vmatpush2.msra.mxu0 %v219
    %221 = vmatprep.subr.mxu0 0.0
    %v222 = vand.u32 %v92, 4294901760
    %223 = vmatpush2.msra.mxu0 %v222
    %224 = vmatprep.subr.mxu0 0.0
    %v225 = vand.u32 %v91, 4294901760
    %226 = vmatpush2.msra.mxu0 %v225
    %227 = vmatprep.subr.mxu0 0.0
    %v228 = vand.u32 %v90, 4294901760
    %229 = vmatpush2.msra.mxu0 %v228
    %230 = vmatprep.subr.mxu0 0.0
    %v231 = vand.u32 %v89, 4294901760
    %232 = vmatpush2.msra.mxu0 %v231
    %v233 = vand.u32 %v44, 4294901760
    %v234 = vsub.f32 %v44, %v233
    %v235 = vand.u32 %v234, 4294901760
    %v236 = vsub.f32 %v234, %v235
    %v237 = vand.u32 %v236, 4294901760
    %238 = vmatprep.mubr.f32.mxu0 %v237
    %v239 = vand.u32 %v43, 4294901760
    %v240 = vsub.f32 %v43, %v239
    %v241 = vand.u32 %v240, 4294901760
    %v242 = vsub.f32 %v240, %v241
    %v243 = vand.u32 %v242, 4294901760
    %244 = vmatmul.mubr.f32.gmra.mxu0 %v243
    %v245 = vpop.f32.mrf.mxu0
    %v246 = vadd.f32 0.0, %v245
    %v247 = vpop.f32.mrf.mxu0
    %v248 = vand.u32 %v48, 4294901760
    %v249 = vsub.f32 %v48, %v248
    %v250 = vand.u32 %v249, 4294901760
    %v251 = vsub.f32 %v249, %v250
    %v252 = vand.u32 %v251, 4294901760
    %253 = vmatprep.mubr.f32.mxu0 %v252
    %v254 = vand.u32 %v47, 4294901760
    %v255 = vsub.f32 %v47, %v254
    %v256 = vand.u32 %v255, 4294901760
    %v257 = vsub.f32 %v255, %v256
    %v258 = vand.u32 %v257, 4294901760
    %259 = vmatmul.mubr.f32.gmra.mxu0 %v258
    %v260 = vpop.f32.mrf.mxu0
    %v261 = vadd.f32 0.0, %v260
    %v262 = vpop.f32.mrf.mxu0
    %263 = vdwg.mxu0
    %264 = vmatprep.subr.mxu0 0.0
    %v265 = vand.u32 %v88, 4294901760
    %v266 = vsub.f32 %v88, %v265
    %v267 = vand.u32 %v266, 4294901760
    %v268 = vsub.f32 %v266, %v267
    %v269 = vand.u32 %v268, 4294901760
    %270 = vmatpush1.msra.mxu0 %v269
    %271 = vmatprep.subr.mxu0 0.0
    %v272 = vand.u32 %v87, 4294901760
    %v273 = vsub.f32 %v87, %v272
    %v274 = vand.u32 %v273, 4294901760
    %v275 = vsub.f32 %v273, %v274
    %v276 = vand.u32 %v275, 4294901760
    %277 = vmatpush1.msra.mxu0 %v276
    %278 = vmatprep.subr.mxu0 0.0
    %v279 = vand.u32 %v86, 4294901760
    %v280 = vsub.f32 %v86, %v279
    %v281 = vand.u32 %v280, 4294901760
    %v282 = vsub.f32 %v280, %v281
    %v283 = vand.u32 %v282, 4294901760
    %284 = vmatpush1.msra.mxu0 %v283
    %285 = vmatprep.subr.mxu0 0.0
    %v286 = vand.u32 %v85, 4294901760
    %v287 = vsub.f32 %v85, %v286
    %v288 = vand.u32 %v287, 4294901760
    %v289 = vsub.f32 %v287, %v288
    %v290 = vand.u32 %v289, 4294901760
    %291 = vmatpush1.msra.mxu0 %v290
    %292 = vmatprep.subr.mxu0 0.0
    %v293 = vand.u32 %v84, 4294901760
    %v294 = vsub.f32 %v84, %v293
    %v295 = vand.u32 %v294, 4294901760
    %v296 = vsub.f32 %v294, %v295
    %v297 = vand.u32 %v296, 4294901760
    %298 = vmatpush1.msra.mxu0 %v297
    %299 = vmatprep.subr.mxu0 0.0
    %v300 = vand.u32 %v83, 4294901760
    %v301 = vsub.f32 %v83, %v300
    %v302 = vand.u32 %v301, 4294901760
    %v303 = vsub.f32 %v301, %v302
    %v304 = vand.u32 %v303, 4294901760
    %305 = vmatpush1.msra.mxu0 %v304
    %306 = vmatprep.subr.mxu0 0.0
    %v307 = vand.u32 %v82, 4294901760
    %v308 = vsub.f32 %v82, %v307
    %v309 = vand.u32 %v308, 4294901760
    %v310 = vsub.f32 %v308, %v309
    %v311 = vand.u32 %v310, 4294901760
    %312 = vmatpush1.msra.mxu0 %v311
    %313 = vmatprep.subr.mxu0 0.0
    %v314 = vand.u32 %v81, 4294901760
    %v315 = vsub.f32 %v81, %v314
    %v316 = vand.u32 %v315, 4294901760
    %v317 = vsub.f32 %v315, %v316
    %v318 = vand.u32 %v317, 4294901760
    %319 = vmatpush1.msra.mxu0 %v318
    %320 = vmatprep.subr.mxu0 0.0
    %v321 = vand.u32 %v80, 4294901760
    %v322 = vsub.f32 %v80, %v321
    %v323 = vand.u32 %v322, 4294901760
    %v324 = vsub.f32 %v322, %v323
    %v325 = vand.u32 %v324, 4294901760
    %326 = vmatpush1.msra.mxu0 %v325
    %327 = vmatprep.subr.mxu0 0.0
    %v328 = vand.u32 %v79, 4294901760
    %v329 = vsub.f32 %v79, %v328
    %v330 = vand.u32 %v329, 4294901760
    %v331 = vsub.f32 %v329, %v330
    %v332 = vand.u32 %v331, 4294901760
    %333 = vmatpush1.msra.mxu0 %v332
    %334 = vmatprep.subr.mxu0 0.0
    %v335 = vand.u32 %v78, 4294901760
    %v336 = vsub.f32 %v78, %v335
    %v337 = vand.u32 %v336, 4294901760
    %v338 = vsub.f32 %v336, %v337
    %v339 = vand.u32 %v338, 4294901760
    %340 = vmatpush1.msra.mxu0 %v339
    %341 = vmatprep.subr.mxu0 0.0
    %v342 = vand.u32 %v77, 4294901760
    %v343 = vsub.f32 %v77, %v342
    %v344 = vand.u32 %v343, 4294901760
    %v345 = vsub.f32 %v343, %v344
    %v346 = vand.u32 %v345, 4294901760
    %347 = vmatpush1.msra.mxu0 %v346
    %348 = vmatprep.subr.mxu0 0.0
    %v349 = vand.u32 %v76, 4294901760
    %v350 = vsub.f32 %v76, %v349
    %v351 = vand.u32 %v350, 4294901760
    %v352 = vsub.f32 %v350, %v351
    %v353 = vand.u32 %v352, 4294901760
    %354 = vmatpush1.msra.mxu0 %v353
    %355 = vmatprep.subr.mxu0 0.0
    %v356 = vand.u32 %v75, 4294901760
    %v357 = vsub.f32 %v75, %v356
    %v358 = vand.u32 %v357, 4294901760
    %v359 = vsub.f32 %v357, %v358
    %v360 = vand.u32 %v359, 4294901760
    %361 = vmatpush1.msra.mxu0 %v360
    %362 = vmatprep.subr.mxu0 0.0
    %v363 = vand.u32 %v74, 4294901760
    %v364 = vsub.f32 %v74, %v363
    %v365 = vand.u32 %v364, 4294901760
    %v366 = vsub.f32 %v364, %v365
    %v367 = vand.u32 %v366, 4294901760
    %368 = vmatpush1.msra.mxu0 %v367
    %369 = vmatprep.subr.mxu0 0.0
    %v370 = vand.u32 %v73, 4294901760
    %v371 = vsub.f32 %v73, %v370
    %v372 = vand.u32 %v371, 4294901760
    %v373 = vsub.f32 %v371, %v372
    %v374 = vand.u32 %v373, 4294901760
    %375 = vmatpush1.msra.mxu0 %v374
    %376 = vmatprep.subr.mxu0 0.0
    %v377 = vand.u32 %v104, 4294901760
    %v378 = vsub.f32 %v104, %v377
    %v379 = vand.u32 %v378, 4294901760
    %v380 = vsub.f32 %v378, %v379
    %v381 = vand.u32 %v380, 4294901760
    %382 = vmatpush2.msra.mxu0 %v381
    %383 = vmatprep.subr.mxu0 0.0
    %v384 = vand.u32 %v103, 4294901760
    %v385 = vsub.f32 %v103, %v384
    %v386 = vand.u32 %v385, 4294901760
    %v387 = vsub.f32 %v385, %v386
    %v388 = vand.u32 %v387, 4294901760
    %389 = vmatpush2.msra.mxu0 %v388
    %390 = vmatprep.subr.mxu0 0.0
    %v391 = vand.u32 %v102, 4294901760
    %v392 = vsub.f32 %v102, %v391
    %v393 = vand.u32 %v392, 4294901760
    %v394 = vsub.f32 %v392, %v393
    %v395 = vand.u32 %v394, 4294901760
    %396 = vmatpush2.msra.mxu0 %v395
    %397 = vmatprep.subr.mxu0 0.0
    %v398 = vand.u32 %v101, 4294901760
    %v399 = vsub.f32 %v101, %v398
    %v400 = vand.u32 %v399, 4294901760
    %v401 = vsub.f32 %v399, %v400
    %v402 = vand.u32 %v401, 4294901760
    %403 = vmatpush2.msra.mxu0 %v402
    %404 = vmatprep.subr.mxu0 0.0
    %v405 = vand.u32 %v100, 4294901760
    %v406 = vsub.f32 %v100, %v405
    %v407 = vand.u32 %v406, 4294901760
    %v408 = vsub.f32 %v406, %v407
    %v409 = vand.u32 %v408, 4294901760
    %410 = vmatpush2.msra.mxu0 %v409
    %411 = vmatprep.subr.mxu0 0.0
    %v412 = vand.u32 %v99, 4294901760
    %v413 = vsub.f32 %v99, %v412
    %v414 = vand.u32 %v413, 4294901760
    %v415 = vsub.f32 %v413, %v414
    %v416 = vand.u32 %v415, 4294901760
    %417 = vmatpush2.msra.mxu0 %v416
    %418 = vmatprep.subr.mxu0 0.0
    %v419 = vand.u32 %v98, 4294901760
    %v420 = vsub.f32 %v98, %v419
    %v421 = vand.u32 %v420, 4294901760
    %v422 = vsub.f32 %v420, %v421
    %v423 = vand.u32 %v422, 4294901760
    %424 = vmatpush2.msra.mxu0 %v423
    %425 = vmatprep.subr.mxu0 0.0
    %v426 = vand.u32 %v97, 4294901760
    %v427 = vsub.f32 %v97, %v426
    %v428 = vand.u32 %v427, 4294901760
    %v429 = vsub.f32 %v427, %v428
    %v430 = vand.u32 %v429, 4294901760
    %431 = vmatpush2.msra.mxu0 %v430
    %432 = vmatprep.subr.mxu0 0.0
    %v433 = vand.u32 %v96, 4294901760
    %v434 = vsub.f32 %v96, %v433
    %v435 = vand.u32 %v434, 4294901760
    %v436 = vsub.f32 %v434, %v435
    %v437 = vand.u32 %v436, 4294901760
    %438 = vmatpush2.msra.mxu0 %v437
    %439 = vmatprep.subr.mxu0 0.0
    %v440 = vand.u32 %v95, 4294901760
    %v441 = vsub.f32 %v95, %v440
    %v442 = vand.u32 %v441, 4294901760
    %v443 = vsub.f32 %v441, %v442
    %v444 = vand.u32 %v443, 4294901760
    %445 = vmatpush2.msra.mxu0 %v444
    %446 = vmatprep.subr.mxu0 0.0
    %v447 = vand.u32 %v94, 4294901760
    %v448 = vsub.f32 %v94, %v447
    %v449 = vand.u32 %v448, 4294901760
    %v450 = vsub.f32 %v448, %v449
    %v451 = vand.u32 %v450, 4294901760
    %452 = vmatpush2.msra.mxu0 %v451
    %453 = vmatprep.subr.mxu0 0.0
    %v454 = vand.u32 %v93, 4294901760
    %v455 = vsub.f32 %v93, %v454
    %v456 = vand.u32 %v455, 4294901760
    %v457 = vsub.f32 %v455, %v456
    %v458 = vand.u32 %v457, 4294901760
    %459 = vmatpush2.msra.mxu0 %v458
    %460 = vmatprep.subr.mxu0 0.0
    %v461 = vand.u32 %v92, 4294901760
    %v462 = vsub.f32 %v92, %v461
    %v463 = vand.u32 %v462, 4294901760
    %v464 = vsub.f32 %v462, %v463
    %v465 = vand.u32 %v464, 4294901760
    %466 = vmatpush2.msra.mxu0 %v465
    %467 = vmatprep.subr.mxu0 0.0
    %v468 = vand.u32 %v91, 4294901760
    %v469 = vsub.f32 %v91, %v468
    %v470 = vand.u32 %v469, 4294901760
    %v471 = vsub.f32 %v469, %v470
    %v472 = vand.u32 %v471, 4294901760
    %473 = vmatpush2.msra.mxu0 %v472
    %474 = vmatprep.subr.mxu0 0.0
    %v475 = vand.u32 %v90, 4294901760
    %v476 = vsub.f32 %v90, %v475
    %v477 = vand.u32 %v476, 4294901760
    %v478 = vsub.f32 %v476, %v477
    %v479 = vand.u32 %v478, 4294901760
    %480 = vmatpush2.msra.mxu0 %v479
    %481 = vmatprep.subr.mxu0 0.0
    %v482 = vand.u32 %v89, 4294901760
    %v483 = vsub.f32 %v89, %v482
    %v484 = vand.u32 %v483, 4294901760
    %v485 = vsub.f32 %v483, %v484
    %v486 = vand.u32 %v485, 4294901760
    %487 = vmatpush2.msra.mxu0 %v486
    %v488 = vand.u32 %v44, 4294901760
    %489 = vmatprep.mubr.f32.mxu0 %v488
    %v490 = vand.u32 %v43, 4294901760
    %491 = vmatmul.mubr.f32.gmra.mxu0 %v490
    %v492 = vpop.f32.mrf.mxu0
    %v493 = vadd.f32 %v246, %v492
    %v494 = vpop.f32.mrf.mxu0
    %v495 = vand.u32 %v48, 4294901760
    %496 = vmatprep.mubr.f32.mxu0 %v495
    %v497 = vand.u32 %v47, 4294901760
    %498 = vmatmul.mubr.f32.gmra.mxu0 %v497
    %v499 = vpop.f32.mrf.mxu0
    %v500 = vadd.f32 %v261, %v499
    %v501 = vpop.f32.mrf.mxu0
    %502 = vdwg.mxu0
    %503 = vmatprep.subr.mxu0 0.0
    %v504 = vand.u32 %v88, 4294901760
    %v505 = vsub.f32 %v88, %v504
    %506 = vmatpush1.msra.mxu0 %v505
    %507 = vmatprep.subr.mxu0 0.0
    %v508 = vand.u32 %v87, 4294901760
    %v509 = vsub.f32 %v87, %v508
    %510 = vmatpush1.msra.mxu0 %v509
    %511 = vmatprep.subr.mxu0 0.0
    %v512 = vand.u32 %v86, 4294901760
    %v513 = vsub.f32 %v86, %v512
    %514 = vmatpush1.msra.mxu0 %v513
    %515 = vmatprep.subr.mxu0 0.0
    %v516 = vand.u32 %v85, 4294901760
    %v517 = vsub.f32 %v85, %v516
    %518 = vmatpush1.msra.mxu0 %v517
    %519 = vmatprep.subr.mxu0 0.0
    %v520 = vand.u32 %v84, 4294901760
    %v521 = vsub.f32 %v84, %v520
    %522 = vmatpush1.msra.mxu0 %v521
    %523 = vmatprep.subr.mxu0 0.0
    %v524 = vand.u32 %v83, 4294901760
    %v525 = vsub.f32 %v83, %v524
    %526 = vmatpush1.msra.mxu0 %v525
    %527 = vmatprep.subr.mxu0 0.0
    %v528 = vand.u32 %v82, 4294901760
    %v529 = vsub.f32 %v82, %v528
    %530 = vmatpush1.msra.mxu0 %v529
    %531 = vmatprep.subr.mxu0 0.0
    %v532 = vand.u32 %v81, 4294901760
    %v533 = vsub.f32 %v81, %v532
    %534 = vmatpush1.msra.mxu0 %v533
    %535 = vmatprep.subr.mxu0 0.0
    %v536 = vand.u32 %v80, 4294901760
    %v537 = vsub.f32 %v80, %v536
    %538 = vmatpush1.msra.mxu0 %v537
    %539 = vmatprep.subr.mxu0 0.0
    %v540 = vand.u32 %v79, 4294901760
    %v541 = vsub.f32 %v79, %v540
    %542 = vmatpush1.msra.mxu0 %v541
    %543 = vmatprep.subr.mxu0 0.0
    %v544 = vand.u32 %v78, 4294901760
    %v545 = vsub.f32 %v78, %v544
    %546 = vmatpush1.msra.mxu0 %v545
    %547 = vmatprep.subr.mxu0 0.0
    %v548 = vand.u32 %v77, 4294901760
    %v549 = vsub.f32 %v77, %v548
    %550 = vmatpush1.msra.mxu0 %v549
    %551 = vmatprep.subr.mxu0 0.0
    %v552 = vand.u32 %v76, 4294901760
    %v553 = vsub.f32 %v76, %v552
    %554 = vmatpush1.msra.mxu0 %v553
    %555 = vmatprep.subr.mxu0 0.0
    %v556 = vand.u32 %v75, 4294901760
    %v557 = vsub.f32 %v75, %v556
    %558 = vmatpush1.msra.mxu0 %v557
    %559 = vmatprep.subr.mxu0 0.0
    %v560 = vand.u32 %v74, 4294901760
    %v561 = vsub.f32 %v74, %v560
    %562 = vmatpush1.msra.mxu0 %v561
    %563 = vmatprep.subr.mxu0 0.0
    %v564 = vand.u32 %v73, 4294901760
    %v565 = vsub.f32 %v73, %v564
    %566 = vmatpush1.msra.mxu0 %v565
    %567 = vmatprep.subr.mxu0 0.0
    %v568 = vand.u32 %v104, 4294901760
    %v569 = vsub.f32 %v104, %v568
    %570 = vmatpush2.msra.mxu0 %v569
    %571 = vmatprep.subr.mxu0 0.0
    %v572 = vand.u32 %v103, 4294901760
    %v573 = vsub.f32 %v103, %v572
    %574 = vmatpush2.msra.mxu0 %v573
    %575 = vmatprep.subr.mxu0 0.0
    %v576 = vand.u32 %v102, 4294901760
    %v577 = vsub.f32 %v102, %v576
    %578 = vmatpush2.msra.mxu0 %v577
    %579 = vmatprep.subr.mxu0 0.0
    %v580 = vand.u32 %v101, 4294901760
    %v581 = vsub.f32 %v101, %v580
    %582 = vmatpush2.msra.mxu0 %v581
    %583 = vmatprep.subr.mxu0 0.0
    %v584 = vand.u32 %v100, 4294901760
    %v585 = vsub.f32 %v100, %v584
    %586 = vmatpush2.msra.mxu0 %v585
    %587 = vmatprep.subr.mxu0 0.0
    %v588 = vand.u32 %v99, 4294901760
    %v589 = vsub.f32 %v99, %v588
    %590 = vmatpush2.msra.mxu0 %v589
    %591 = vmatprep.subr.mxu0 0.0
    %v592 = vand.u32 %v98, 4294901760
    %v593 = vsub.f32 %v98, %v592
    %594 = vmatpush2.msra.mxu0 %v593
    %595 = vmatprep.subr.mxu0 0.0
    %v596 = vand.u32 %v97, 4294901760
    %v597 = vsub.f32 %v97, %v596
    %598 = vmatpush2.msra.mxu0 %v597
    %599 = vmatprep.subr.mxu0 0.0
    %v600 = vand.u32 %v96, 4294901760
    %v601 = vsub.f32 %v96, %v600
    %602 = vmatpush2.msra.mxu0 %v601
    %603 = vmatprep.subr.mxu0 0.0
    %v604 = vand.u32 %v95, 4294901760
    %v605 = vsub.f32 %v95, %v604
    %606 = vmatpush2.msra.mxu0 %v605
    %607 = vmatprep.subr.mxu0 0.0
    %v608 = vand.u32 %v94, 4294901760
    %v609 = vsub.f32 %v94, %v608
    %610 = vmatpush2.msra.mxu0 %v609
    %611 = vmatprep.subr.mxu0 0.0
    %v612 = vand.u32 %v93, 4294901760
    %v613 = vsub.f32 %v93, %v612
    %614 = vmatpush2.msra.mxu0 %v613
    %615 = vmatprep.subr.mxu0 0.0
    %v616 = vand.u32 %v92, 4294901760
    %v617 = vsub.f32 %v92, %v616
    %618 = vmatpush2.msra.mxu0 %v617
    %619 = vmatprep.subr.mxu0 0.0
    %v620 = vand.u32 %v91, 4294901760
    %v621 = vsub.f32 %v91, %v620
    %622 = vmatpush2.msra.mxu0 %v621
    %623 = vmatprep.subr.mxu0 0.0
    %v624 = vand.u32 %v90, 4294901760
    %v625 = vsub.f32 %v90, %v624
    %626 = vmatpush2.msra.mxu0 %v625
    %627 = vmatprep.subr.mxu0 0.0
    %v628 = vand.u32 %v89, 4294901760
    %v629 = vsub.f32 %v89, %v628
    %630 = vmatpush2.msra.mxu0 %v629
    %v631 = vand.u32 %v44, 4294901760
    %v632 = vsub.f32 %v44, %v631
    %633 = vmatprep.mubr.f32.mxu0 %v632
    %v634 = vand.u32 %v43, 4294901760
    %v635 = vsub.f32 %v43, %v634
    %636 = vmatmul.mubr.f32.gmra.mxu0 %v635
    %v637 = vpop.f32.mrf.mxu0
    %v638 = vadd.f32 %v493, %v637
    %v639 = vpop.f32.mrf.mxu0
    %v640 = vand.u32 %v48, 4294901760
    %v641 = vsub.f32 %v48, %v640
    %642 = vmatprep.mubr.f32.mxu0 %v641
    %v643 = vand.u32 %v47, 4294901760
    %v644 = vsub.f32 %v47, %v643
    %645 = vmatmul.mubr.f32.gmra.mxu0 %v644
    %v646 = vpop.f32.mrf.mxu0
    %v647 = vadd.f32 %v500, %v646
    %v648 = vpop.f32.mrf.mxu0
    %649 = vdwg.mxu0
    %650 = vmatprep.subr.mxu0 0.0
    %v651 = vand.u32 %v88, 4294901760
    %652 = vmatpush1.msra.mxu0 %v651
    %653 = vmatprep.subr.mxu0 0.0
    %v654 = vand.u32 %v87, 4294901760
    %655 = vmatpush1.msra.mxu0 %v654
    %656 = vmatprep.subr.mxu0 0.0
    %v657 = vand.u32 %v86, 4294901760
    %658 = vmatpush1.msra.mxu0 %v657
    %659 = vmatprep.subr.mxu0 0.0
    %v660 = vand.u32 %v85, 4294901760
    %661 = vmatpush1.msra.mxu0 %v660
    %662 = vmatprep.subr.mxu0 0.0
    %v663 = vand.u32 %v84, 4294901760
    %664 = vmatpush1.msra.mxu0 %v663
    %665 = vmatprep.subr.mxu0 0.0
    %v666 = vand.u32 %v83, 4294901760
    %667 = vmatpush1.msra.mxu0 %v666
    %668 = vmatprep.subr.mxu0 0.0
    %v669 = vand.u32 %v82, 4294901760
    %670 = vmatpush1.msra.mxu0 %v669
    %671 = vmatprep.subr.mxu0 0.0
    %v672 = vand.u32 %v81, 4294901760
    %673 = vmatpush1.msra.mxu0 %v672
    %674 = vmatprep.subr.mxu0 0.0
    %v675 = vand.u32 %v80, 4294901760
    %676 = vmatpush1.msra.mxu0 %v675
    %677 = vmatprep.subr.mxu0 0.0
    %v678 = vand.u32 %v79, 4294901760
    %679 = vmatpush1.msra.mxu0 %v678
    %680 = vmatprep.subr.mxu0 0.0
    %v681 = vand.u32 %v78, 4294901760
    %682 = vmatpush1.msra.mxu0 %v681
    %683 = vmatprep.subr.mxu0 0.0
    %v684 = vand.u32 %v77, 4294901760
    %685 = vmatpush1.msra.mxu0 %v684
    %686 = vmatprep.subr.mxu0 0.0
    %v687 = vand.u32 %v76, 4294901760
    %688 = vmatpush1.msra.mxu0 %v687
    %689 = vmatprep.subr.mxu0 0.0
    %v690 = vand.u32 %v75, 4294901760
    %691 = vmatpush1.msra.mxu0 %v690
    %692 = vmatprep.subr.mxu0 0.0
    %v693 = vand.u32 %v74, 4294901760
    %694 = vmatpush1.msra.mxu0 %v693
    %695 = vmatprep.subr.mxu0 0.0
    %v696 = vand.u32 %v73, 4294901760
    %697 = vmatpush1.msra.mxu0 %v696
    %698 = vmatprep.subr.mxu0 0.0
    %v699 = vand.u32 %v104, 4294901760
    %700 = vmatpush2.msra.mxu0 %v699
    %701 = vmatprep.subr.mxu0 0.0
    %v702 = vand.u32 %v103, 4294901760
    %703 = vmatpush2.msra.mxu0 %v702
    %704 = vmatprep.subr.mxu0 0.0
    %v705 = vand.u32 %v102, 4294901760
    %706 = vmatpush2.msra.mxu0 %v705
    %707 = vmatprep.subr.mxu0 0.0
    %v708 = vand.u32 %v101, 4294901760
    %709 = vmatpush2.msra.mxu0 %v708
    %710 = vmatprep.subr.mxu0 0.0
    %v711 = vand.u32 %v100, 4294901760
    %712 = vmatpush2.msra.mxu0 %v711
    %713 = vmatprep.subr.mxu0 0.0
    %v714 = vand.u32 %v99, 4294901760
    %715 = vmatpush2.msra.mxu0 %v714
    %716 = vmatprep.subr.mxu0 0.0
    %v717 = vand.u32 %v98, 4294901760
    %718 = vmatpush2.msra.mxu0 %v717
    %719 = vmatprep.subr.mxu0 0.0
    %v720 = vand.u32 %v97, 4294901760
    %721 = vmatpush2.msra.mxu0 %v720
    %722 = vmatprep.subr.mxu0 0.0
    %v723 = vand.u32 %v96, 4294901760
    %724 = vmatpush2.msra.mxu0 %v723
    %725 = vmatprep.subr.mxu0 0.0
    %v726 = vand.u32 %v95, 4294901760
    %727 = vmatpush2.msra.mxu0 %v726
    %728 = vmatprep.subr.mxu0 0.0
    %v729 = vand.u32 %v94, 4294901760
    %730 = vmatpush2.msra.mxu0 %v729
    %731 = vmatprep.subr.mxu0 0.0
    %v732 = vand.u32 %v93, 4294901760
    %733 = vmatpush2.msra.mxu0 %v732
    %734 = vmatprep.subr.mxu0 0.0
    %v735 = vand.u32 %v92, 4294901760
    %736 = vmatpush2.msra.mxu0 %v735
    %737 = vmatprep.subr.mxu0 0.0
    %v738 = vand.u32 %v91, 4294901760
    %739 = vmatpush2.msra.mxu0 %v738
    %740 = vmatprep.subr.mxu0 0.0
    %v741 = vand.u32 %v90, 4294901760
    %742 = vmatpush2.msra.mxu0 %v741
    %743 = vmatprep.subr.mxu0 0.0
    %v744 = vand.u32 %v89, 4294901760
    %745 = vmatpush2.msra.mxu0 %v744
    %v746 = vand.u32 %v44, 4294901760
    %v747 = vsub.f32 %v44, %v746
    %v748 = vand.u32 %v747, 4294901760
    %749 = vmatprep.mubr.f32.mxu0 %v748
    %v750 = vand.u32 %v43, 4294901760
    %v751 = vsub.f32 %v43, %v750
    %v752 = vand.u32 %v751, 4294901760
    %753 = vmatmul.mubr.f32.gmra.mxu0 %v752
    %v754 = vpop.f32.mrf.mxu0
    %v755 = vadd.f32 %v638, %v754
    %v756 = vpop.f32.mrf.mxu0
    %v757 = vand.u32 %v48, 4294901760
    %v758 = vsub.f32 %v48, %v757
    %v759 = vand.u32 %v758, 4294901760
    %760 = vmatprep.mubr.f32.mxu0 %v759
    %v761 = vand.u32 %v47, 4294901760
    %v762 = vsub.f32 %v47, %v761
    %v763 = vand.u32 %v762, 4294901760
    %764 = vmatmul.mubr.f32.gmra.mxu0 %v763
    %v765 = vpop.f32.mrf.mxu0
    %v766 = vadd.f32 %v647, %v765
    %v767 = vpop.f32.mrf.mxu0
    %768 = vdwg.mxu0
    %769 = vmatprep.subr.mxu0 0.0
    %v770 = vand.u32 %v88, 4294901760
    %v771 = vsub.f32 %v88, %v770
    %v772 = vand.u32 %v771, 4294901760
    %773 = vmatpush1.msra.mxu0 %v772
    %774 = vmatprep.subr.mxu0 0.0
    %v775 = vand.u32 %v87, 4294901760
    %v776 = vsub.f32 %v87, %v775
    %v777 = vand.u32 %v776, 4294901760
    %778 = vmatpush1.msra.mxu0 %v777
    %779 = vmatprep.subr.mxu0 0.0
    %v780 = vand.u32 %v86, 4294901760
    %v781 = vsub.f32 %v86, %v780
    %v782 = vand.u32 %v781, 4294901760
    %783 = vmatpush1.msra.mxu0 %v782
    %784 = vmatprep.subr.mxu0 0.0
    %v785 = vand.u32 %v85, 4294901760
    %v786 = vsub.f32 %v85, %v785
    %v787 = vand.u32 %v786, 4294901760
    %788 = vmatpush1.msra.mxu0 %v787
    %789 = vmatprep.subr.mxu0 0.0
    %v790 = vand.u32 %v84, 4294901760
    %v791 = vsub.f32 %v84, %v790
    %v792 = vand.u32 %v791, 4294901760
    %793 = vmatpush1.msra.mxu0 %v792
    %794 = vmatprep.subr.mxu0 0.0
    %v795 = vand.u32 %v83, 4294901760
    %v796 = vsub.f32 %v83, %v795
    %v797 = vand.u32 %v796, 4294901760
    %798 = vmatpush1.msra.mxu0 %v797
    %799 = vmatprep.subr.mxu0 0.0
    %v800 = vand.u32 %v82, 4294901760
    %v801 = vsub.f32 %v82, %v800
    %v802 = vand.u32 %v801, 4294901760
    %803 = vmatpush1.msra.mxu0 %v802
    %804 = vmatprep.subr.mxu0 0.0
    %v805 = vand.u32 %v81, 4294901760
    %v806 = vsub.f32 %v81, %v805
    %v807 = vand.u32 %v806, 4294901760
    %808 = vmatpush1.msra.mxu0 %v807
    %809 = vmatprep.subr.mxu0 0.0
    %v810 = vand.u32 %v80, 4294901760
    %v811 = vsub.f32 %v80, %v810
    %v812 = vand.u32 %v811, 4294901760
    %813 = vmatpush1.msra.mxu0 %v812
    %814 = vmatprep.subr.mxu0 0.0
    %v815 = vand.u32 %v79, 4294901760
    %v816 = vsub.f32 %v79, %v815
    %v817 = vand.u32 %v816, 4294901760
    %818 = vmatpush1.msra.mxu0 %v817
    %819 = vmatprep.subr.mxu0 0.0
    %v820 = vand.u32 %v78, 4294901760
    %v821 = vsub.f32 %v78, %v820
    %v822 = vand.u32 %v821, 4294901760
    %823 = vmatpush1.msra.mxu0 %v822
    %824 = vmatprep.subr.mxu0 0.0
    %v825 = vand.u32 %v77, 4294901760
    %v826 = vsub.f32 %v77, %v825
    %v827 = vand.u32 %v826, 4294901760
    %828 = vmatpush1.msra.mxu0 %v827
    %829 = vmatprep.subr.mxu0 0.0
    %v830 = vand.u32 %v76, 4294901760
    %v831 = vsub.f32 %v76, %v830
    %v832 = vand.u32 %v831, 4294901760
    %833 = vmatpush1.msra.mxu0 %v832
    %834 = vmatprep.subr.mxu0 0.0
    %v835 = vand.u32 %v75, 4294901760
    %v836 = vsub.f32 %v75, %v835
    %v837 = vand.u32 %v836, 4294901760
    %838 = vmatpush1.msra.mxu0 %v837
    %839 = vmatprep.subr.mxu0 0.0
    %v840 = vand.u32 %v74, 4294901760
    %v841 = vsub.f32 %v74, %v840
    %v842 = vand.u32 %v841, 4294901760
    %843 = vmatpush1.msra.mxu0 %v842
    %844 = vmatprep.subr.mxu0 0.0
    %v845 = vand.u32 %v73, 4294901760
    %v846 = vsub.f32 %v73, %v845
    %v847 = vand.u32 %v846, 4294901760
    %848 = vmatpush1.msra.mxu0 %v847
    %849 = vmatprep.subr.mxu0 0.0
    %v850 = vand.u32 %v104, 4294901760
    %v851 = vsub.f32 %v104, %v850
    %v852 = vand.u32 %v851, 4294901760
    %853 = vmatpush2.msra.mxu0 %v852
    %854 = vmatprep.subr.mxu0 0.0
    %v855 = vand.u32 %v103, 4294901760
    %v856 = vsub.f32 %v103, %v855
    %v857 = vand.u32 %v856, 4294901760
    %858 = vmatpush2.msra.mxu0 %v857
    %859 = vmatprep.subr.mxu0 0.0
    %v860 = vand.u32 %v102, 4294901760
    %v861 = vsub.f32 %v102, %v860
    %v862 = vand.u32 %v861, 4294901760
    %863 = vmatpush2.msra.mxu0 %v862
    %864 = vmatprep.subr.mxu0 0.0
    %v865 = vand.u32 %v101, 4294901760
    %v866 = vsub.f32 %v101, %v865
    %v867 = vand.u32 %v866, 4294901760
    %868 = vmatpush2.msra.mxu0 %v867
    %869 = vmatprep.subr.mxu0 0.0
    %v870 = vand.u32 %v100, 4294901760
    %v871 = vsub.f32 %v100, %v870
    %v872 = vand.u32 %v871, 4294901760
    %873 = vmatpush2.msra.mxu0 %v872
    %874 = vmatprep.subr.mxu0 0.0
    %v875 = vand.u32 %v99, 4294901760
    %v876 = vsub.f32 %v99, %v875
    %v877 = vand.u32 %v876, 4294901760
    %878 = vmatpush2.msra.mxu0 %v877
    %879 = vmatprep.subr.mxu0 0.0
    %v880 = vand.u32 %v98, 4294901760
    %v881 = vsub.f32 %v98, %v880
    %v882 = vand.u32 %v881, 4294901760
    %883 = vmatpush2.msra.mxu0 %v882
    %884 = vmatprep.subr.mxu0 0.0
    %v885 = vand.u32 %v97, 4294901760
    %v886 = vsub.f32 %v97, %v885
    %v887 = vand.u32 %v886, 4294901760
    %888 = vmatpush2.msra.mxu0 %v887
    %889 = vmatprep.subr.mxu0 0.0
    %v890 = vand.u32 %v96, 4294901760
    %v891 = vsub.f32 %v96, %v890
    %v892 = vand.u32 %v891, 4294901760
    %893 = vmatpush2.msra.mxu0 %v892
    %894 = vmatprep.subr.mxu0 0.0
    %v895 = vand.u32 %v95, 4294901760
    %v896 = vsub.f32 %v95, %v895
    %v897 = vand.u32 %v896, 4294901760
    %898 = vmatpush2.msra.mxu0 %v897
    %899 = vmatprep.subr.mxu0 0.0
    %v900 = vand.u32 %v94, 4294901760
    %v901 = vsub.f32 %v94, %v900
    %v902 = vand.u32 %v901, 4294901760
    %903 = vmatpush2.msra.mxu0 %v902
    %904 = vmatprep.subr.mxu0 0.0
    %v905 = vand.u32 %v93, 4294901760
    %v906 = vsub.f32 %v93, %v905
    %v907 = vand.u32 %v906, 4294901760
    %908 = vmatpush2.msra.mxu0 %v907
    %909 = vmatprep.subr.mxu0 0.0
    %v910 = vand.u32 %v92, 4294901760
    %v911 = vsub.f32 %v92, %v910
    %v912 = vand.u32 %v911, 4294901760
    %913 = vmatpush2.msra.mxu0 %v912
    %914 = vmatprep.subr.mxu0 0.0
    %v915 = vand.u32 %v91, 4294901760
    %v916 = vsub.f32 %v91, %v915
    %v917 = vand.u32 %v916, 4294901760
    %918 = vmatpush2.msra.mxu0 %v917
    %919 = vmatprep.subr.mxu0 0.0
    %v920 = vand.u32 %v90, 4294901760
    %v921 = vsub.f32 %v90, %v920
    %v922 = vand.u32 %v921, 4294901760
    %923 = vmatpush2.msra.mxu0 %v922
    %924 = vmatprep.subr.mxu0 0.0
    %v925 = vand.u32 %v89, 4294901760
    %v926 = vsub.f32 %v89, %v925
    %v927 = vand.u32 %v926, 4294901760
    %928 = vmatpush2.msra.mxu0 %v927
    %v929 = vand.u32 %v44, 4294901760
    %930 = vmatprep.mubr.f32.mxu0 %v929
    %v931 = vand.u32 %v43, 4294901760
    %932 = vmatmul.mubr.f32.gmra.mxu0 %v931
    %v933 = vpop.f32.mrf.mxu0
    %v934 = vadd.f32 %v755, %v933
    %v935 = vpop.f32.mrf.mxu0
    %v936 = vand.u32 %v48, 4294901760
    %937 = vmatprep.mubr.f32.mxu0 %v936
    %v938 = vand.u32 %v47, 4294901760
    %939 = vmatmul.mubr.f32.gmra.mxu0 %v938
    %v940 = vpop.f32.mrf.mxu0
    %v941 = vadd.f32 %v766, %v940
    %v942 = vpop.f32.mrf.mxu0
    %943 = vdwg.mxu0
    %944 = vmatprep.subr.mxu0 0.0
    %v945 = vand.u32 %v88, 4294901760
    %946 = vmatpush1.msra.mxu0 %v945
    %947 = vmatprep.subr.mxu0 0.0
    %v948 = vand.u32 %v87, 4294901760
    %949 = vmatpush1.msra.mxu0 %v948
    %950 = vmatprep.subr.mxu0 0.0
    %v951 = vand.u32 %v86, 4294901760
    %952 = vmatpush1.msra.mxu0 %v951
    %953 = vmatprep.subr.mxu0 0.0
    %v954 = vand.u32 %v85, 4294901760
    %955 = vmatpush1.msra.mxu0 %v954
    %956 = vmatprep.subr.mxu0 0.0
    %v957 = vand.u32 %v84, 4294901760
    %958 = vmatpush1.msra.mxu0 %v957
    %959 = vmatprep.subr.mxu0 0.0
    %v960 = vand.u32 %v83, 4294901760
    %961 = vmatpush1.msra.mxu0 %v960
    %962 = vmatprep.subr.mxu0 0.0
    %v963 = vand.u32 %v82, 4294901760
    %964 = vmatpush1.msra.mxu0 %v963
    %965 = vmatprep.subr.mxu0 0.0
    %v966 = vand.u32 %v81, 4294901760
    %967 = vmatpush1.msra.mxu0 %v966
    %968 = vmatprep.subr.mxu0 0.0
    %v969 = vand.u32 %v80, 4294901760
    %970 = vmatpush1.msra.mxu0 %v969
    %971 = vmatprep.subr.mxu0 0.0
    %v972 = vand.u32 %v79, 4294901760
    %973 = vmatpush1.msra.mxu0 %v972
    %974 = vmatprep.subr.mxu0 0.0
    %v975 = vand.u32 %v78, 4294901760
    %976 = vmatpush1.msra.mxu0 %v975
    %977 = vmatprep.subr.mxu0 0.0
    %v978 = vand.u32 %v77, 4294901760
    %979 = vmatpush1.msra.mxu0 %v978
    %980 = vmatprep.subr.mxu0 0.0
    %v981 = vand.u32 %v76, 4294901760
    %982 = vmatpush1.msra.mxu0 %v981
    %983 = vmatprep.subr.mxu0 0.0
    %v984 = vand.u32 %v75, 4294901760
    %985 = vmatpush1.msra.mxu0 %v984
    %986 = vmatprep.subr.mxu0 0.0
    %v987 = vand.u32 %v74, 4294901760
    %988 = vmatpush1.msra.mxu0 %v987
    %989 = vmatprep.subr.mxu0 0.0
    %v990 = vand.u32 %v73, 4294901760
    %991 = vmatpush1.msra.mxu0 %v990
    %992 = vmatprep.subr.mxu0 0.0
    %v993 = vand.u32 %v104, 4294901760
    %994 = vmatpush2.msra.mxu0 %v993
    %995 = vmatprep.subr.mxu0 0.0
    %v996 = vand.u32 %v103, 4294901760
    %997 = vmatpush2.msra.mxu0 %v996
    %998 = vmatprep.subr.mxu0 0.0
    %v999 = vand.u32 %v102, 4294901760
    %1000 = vmatpush2.msra.mxu0 %v999
    %1001 = vmatprep.subr.mxu0 0.0
    %v1002 = vand.u32 %v101, 4294901760
    %1003 = vmatpush2.msra.mxu0 %v1002
    %1004 = vmatprep.subr.mxu0 0.0
    %v1005 = vand.u32 %v100, 4294901760
    %1006 = vmatpush2.msra.mxu0 %v1005
    %1007 = vmatprep.subr.mxu0 0.0
    %v1008 = vand.u32 %v99, 4294901760
    %1009 = vmatpush2.msra.mxu0 %v1008
    %1010 = vmatprep.subr.mxu0 0.0
    %v1011 = vand.u32 %v98, 4294901760
    %1012 = vmatpush2.msra.mxu0 %v1011
    %1013 = vmatprep.subr.mxu0 0.0
    %v1014 = vand.u32 %v97, 4294901760
    %1015 = vmatpush2.msra.mxu0 %v1014
    %1016 = vmatprep.subr.mxu0 0.0
    %v1017 = vand.u32 %v96, 4294901760
    %1018 = vmatpush2.msra.mxu0 %v1017
    %1019 = vmatprep.subr.mxu0 0.0
    %v1020 = vand.u32 %v95, 4294901760
    %1021 = vmatpush2.msra.mxu0 %v1020
    %1022 = vmatprep.subr.mxu0 0.0
    %v1023 = vand.u32 %v94, 4294901760
    %1024 = vmatpush2.msra.mxu0 %v1023
    %1025 = vmatprep.subr.mxu0 0.0
    %v1026 = vand.u32 %v93, 4294901760
    %1027 = vmatpush2.msra.mxu0 %v1026
    %1028 = vmatprep.subr.mxu0 0.0
    %v1029 = vand.u32 %v92, 4294901760
    %1030 = vmatpush2.msra.mxu0 %v1029
    %1031 = vmatprep.subr.mxu0 0.0
    %v1032 = vand.u32 %v91, 4294901760
    %1033 = vmatpush2.msra.mxu0 %v1032
    %1034 = vmatprep.subr.mxu0 0.0
    %v1035 = vand.u32 %v90, 4294901760
    %1036 = vmatpush2.msra.mxu0 %v1035
    %1037 = vmatprep.subr.mxu0 0.0
    %v1038 = vand.u32 %v89, 4294901760
    %1039 = vmatpush2.msra.mxu0 %v1038
    %v1040 = vand.u32 %v44, 4294901760
    %1041 = vmatprep.mubr.f32.mxu0 %v1040
    %v1042 = vand.u32 %v43, 4294901760
    %1043 = vmatmul.mubr.f32.gmra.mxu0 %v1042
    %v1044 = vpop.f32.mrf.mxu0
    %v1045 = vadd.f32 %v934, %v1044
    %v1046 = vpop.f32.mrf.mxu0
    %v1047 = vand.u32 %v48, 4294901760
    %1048 = vmatprep.mubr.f32.mxu0 %v1047
    %v1049 = vand.u32 %v47, 4294901760
    %1050 = vmatmul.mubr.f32.gmra.mxu0 %v1049
    %v1051 = vpop.f32.mrf.mxu0
    %v1052 = vadd.f32 %v941, %v1051
    %v1053 = vpop.f32.mrf.mxu0
    %1054 = vdwg.mxu0
    %1055 = vmatprep.subr.mxu0 0.0
    %v1056 = vand.u32 %v120, 4294901760
    %1057 = vmatpush1.msra.mxu0 %v1056
    %1058 = vmatprep.subr.mxu0 0.0
    %v1059 = vand.u32 %v119, 4294901760
    %1060 = vmatpush1.msra.mxu0 %v1059
    %1061 = vmatprep.subr.mxu0 0.0
    %v1062 = vand.u32 %v118, 4294901760
    %1063 = vmatpush1.msra.mxu0 %v1062
    %1064 = vmatprep.subr.mxu0 0.0
    %v1065 = vand.u32 %v117, 4294901760
    %1066 = vmatpush1.msra.mxu0 %v1065
    %1067 = vmatprep.subr.mxu0 0.0
    %v1068 = vand.u32 %v116, 4294901760
    %1069 = vmatpush1.msra.mxu0 %v1068
    %1070 = vmatprep.subr.mxu0 0.0
    %v1071 = vand.u32 %v115, 4294901760
    %1072 = vmatpush1.msra.mxu0 %v1071
    %1073 = vmatprep.subr.mxu0 0.0
    %v1074 = vand.u32 %v114, 4294901760
    %1075 = vmatpush1.msra.mxu0 %v1074
    %1076 = vmatprep.subr.mxu0 0.0
    %v1077 = vand.u32 %v113, 4294901760
    %1078 = vmatpush1.msra.mxu0 %v1077
    %1079 = vmatprep.subr.mxu0 0.0
    %v1080 = vand.u32 %v112, 4294901760
    %1081 = vmatpush1.msra.mxu0 %v1080
    %1082 = vmatprep.subr.mxu0 0.0
    %v1083 = vand.u32 %v111, 4294901760
    %1084 = vmatpush1.msra.mxu0 %v1083
    %1085 = vmatprep.subr.mxu0 0.0
    %v1086 = vand.u32 %v110, 4294901760
    %1087 = vmatpush1.msra.mxu0 %v1086
    %1088 = vmatprep.subr.mxu0 0.0
    %v1089 = vand.u32 %v109, 4294901760
    %1090 = vmatpush1.msra.mxu0 %v1089
    %1091 = vmatprep.subr.mxu0 0.0
    %v1092 = vand.u32 %v108, 4294901760
    %1093 = vmatpush1.msra.mxu0 %v1092
    %1094 = vmatprep.subr.mxu0 0.0
    %v1095 = vand.u32 %v107, 4294901760
    %1096 = vmatpush1.msra.mxu0 %v1095
    %1097 = vmatprep.subr.mxu0 0.0
    %v1098 = vand.u32 %v106, 4294901760
    %1099 = vmatpush1.msra.mxu0 %v1098
    %1100 = vmatprep.subr.mxu0 0.0
    %v1101 = vand.u32 %v105, 4294901760
    %1102 = vmatpush1.msra.mxu0 %v1101
    %1103 = vmatprep.subr.mxu0 0.0
    %v1104 = vand.u32 %v136, 4294901760
    %1105 = vmatpush2.msra.mxu0 %v1104
    %1106 = vmatprep.subr.mxu0 0.0
    %v1107 = vand.u32 %v135, 4294901760
    %1108 = vmatpush2.msra.mxu0 %v1107
    %1109 = vmatprep.subr.mxu0 0.0
    %v1110 = vand.u32 %v134, 4294901760
    %1111 = vmatpush2.msra.mxu0 %v1110
    %1112 = vmatprep.subr.mxu0 0.0
    %v1113 = vand.u32 %v133, 4294901760
    %1114 = vmatpush2.msra.mxu0 %v1113
    %1115 = vmatprep.subr.mxu0 0.0
    %v1116 = vand.u32 %v132, 4294901760
    %1117 = vmatpush2.msra.mxu0 %v1116
    %1118 = vmatprep.subr.mxu0 0.0
    %v1119 = vand.u32 %v131, 4294901760
    %1120 = vmatpush2.msra.mxu0 %v1119
    %1121 = vmatprep.subr.mxu0 0.0
    %v1122 = vand.u32 %v130, 4294901760
    %1123 = vmatpush2.msra.mxu0 %v1122
    %1124 = vmatprep.subr.mxu0 0.0
    %v1125 = vand.u32 %v129, 4294901760
    %1126 = vmatpush2.msra.mxu0 %v1125
    %1127 = vmatprep.subr.mxu0 0.0
    %v1128 = vand.u32 %v128, 4294901760
    %1129 = vmatpush2.msra.mxu0 %v1128
    %1130 = vmatprep.subr.mxu0 0.0
    %v1131 = vand.u32 %v127, 4294901760
    %1132 = vmatpush2.msra.mxu0 %v1131
    %1133 = vmatprep.subr.mxu0 0.0
    %v1134 = vand.u32 %v126, 4294901760
    %1135 = vmatpush2.msra.mxu0 %v1134
    %1136 = vmatprep.subr.mxu0 0.0
    %v1137 = vand.u32 %v125, 4294901760
    %1138 = vmatpush2.msra.mxu0 %v1137
    %1139 = vmatprep.subr.mxu0 0.0
    %v1140 = vand.u32 %v124, 4294901760
    %1141 = vmatpush2.msra.mxu0 %v1140
    %1142 = vmatprep.subr.mxu0 0.0
    %v1143 = vand.u32 %v123, 4294901760
    %1144 = vmatpush2.msra.mxu0 %v1143
    %1145 = vmatprep.subr.mxu0 0.0
    %v1146 = vand.u32 %v122, 4294901760
    %1147 = vmatpush2.msra.mxu0 %v1146
    %1148 = vmatprep.subr.mxu0 0.0
    %v1149 = vand.u32 %v121, 4294901760
    %1150 = vmatpush2.msra.mxu0 %v1149
    %v1151 = vand.u32 %v46, 4294901760
    %v1152 = vsub.f32 %v46, %v1151
    %v1153 = vand.u32 %v1152, 4294901760
    %v1154 = vsub.f32 %v1152, %v1153
    %v1155 = vand.u32 %v1154, 4294901760
    %1156 = vmatprep.mubr.f32.mxu0 %v1155
    %v1157 = vand.u32 %v45, 4294901760
    %v1158 = vsub.f32 %v45, %v1157
    %v1159 = vand.u32 %v1158, 4294901760
    %v1160 = vsub.f32 %v1158, %v1159
    %v1161 = vand.u32 %v1160, 4294901760
    %1162 = vmatmul.mubr.f32.gmra.mxu0 %v1161
    %v1163 = vpop.f32.mrf.mxu0
    %v1164 = vadd.f32 %v1045, %v1163
    %v1165 = vpop.f32.mrf.mxu0
    %v1166 = vand.u32 %v50, 4294901760
    %v1167 = vsub.f32 %v50, %v1166
    %v1168 = vand.u32 %v1167, 4294901760
    %v1169 = vsub.f32 %v1167, %v1168
    %v1170 = vand.u32 %v1169, 4294901760
    %1171 = vmatprep.mubr.f32.mxu0 %v1170
    %v1172 = vand.u32 %v49, 4294901760
    %v1173 = vsub.f32 %v49, %v1172
    %v1174 = vand.u32 %v1173, 4294901760
    %v1175 = vsub.f32 %v1173, %v1174
    %v1176 = vand.u32 %v1175, 4294901760
    %1177 = vmatmul.mubr.f32.gmra.mxu0 %v1176
    %v1178 = vpop.f32.mrf.mxu0
    %v1179 = vadd.f32 %v1052, %v1178
    %v1180 = vpop.f32.mrf.mxu0
    %1181 = vdwg.mxu0
    %1182 = vmatprep.subr.mxu0 0.0
    %v1183 = vand.u32 %v120, 4294901760
    %v1184 = vsub.f32 %v120, %v1183
    %v1185 = vand.u32 %v1184, 4294901760
    %v1186 = vsub.f32 %v1184, %v1185
    %v1187 = vand.u32 %v1186, 4294901760
    %1188 = vmatpush1.msra.mxu0 %v1187
    %1189 = vmatprep.subr.mxu0 0.0
    %v1190 = vand.u32 %v119, 4294901760
    %v1191 = vsub.f32 %v119, %v1190
    %v1192 = vand.u32 %v1191, 4294901760
    %v1193 = vsub.f32 %v1191, %v1192
    %v1194 = vand.u32 %v1193, 4294901760
    %1195 = vmatpush1.msra.mxu0 %v1194
    %1196 = vmatprep.subr.mxu0 0.0
    %v1197 = vand.u32 %v118, 4294901760
    %v1198 = vsub.f32 %v118, %v1197
    %v1199 = vand.u32 %v1198, 4294901760
    %v1200 = vsub.f32 %v1198, %v1199
    %v1201 = vand.u32 %v1200, 4294901760
    %1202 = vmatpush1.msra.mxu0 %v1201
    %1203 = vmatprep.subr.mxu0 0.0
    %v1204 = vand.u32 %v117, 4294901760
    %v1205 = vsub.f32 %v117, %v1204
    %v1206 = vand.u32 %v1205, 4294901760
    %v1207 = vsub.f32 %v1205, %v1206
    %v1208 = vand.u32 %v1207, 4294901760
    %1209 = vmatpush1.msra.mxu0 %v1208
    %1210 = vmatprep.subr.mxu0 0.0
    %v1211 = vand.u32 %v116, 4294901760
    %v1212 = vsub.f32 %v116, %v1211
    %v1213 = vand.u32 %v1212, 4294901760
    %v1214 = vsub.f32 %v1212, %v1213
    %v1215 = vand.u32 %v1214, 4294901760
    %1216 = vmatpush1.msra.mxu0 %v1215
    %1217 = vmatprep.subr.mxu0 0.0
    %v1218 = vand.u32 %v115, 4294901760
    %v1219 = vsub.f32 %v115, %v1218
    %v1220 = vand.u32 %v1219, 4294901760
    %v1221 = vsub.f32 %v1219, %v1220
    %v1222 = vand.u32 %v1221, 4294901760
    %1223 = vmatpush1.msra.mxu0 %v1222
    %1224 = vmatprep.subr.mxu0 0.0
    %v1225 = vand.u32 %v114, 4294901760
    %v1226 = vsub.f32 %v114, %v1225
    %v1227 = vand.u32 %v1226, 4294901760
    %v1228 = vsub.f32 %v1226, %v1227
    %v1229 = vand.u32 %v1228, 4294901760
    %1230 = vmatpush1.msra.mxu0 %v1229
    %1231 = vmatprep.subr.mxu0 0.0
    %v1232 = vand.u32 %v113, 4294901760
    %v1233 = vsub.f32 %v113, %v1232
    %v1234 = vand.u32 %v1233, 4294901760
    %v1235 = vsub.f32 %v1233, %v1234
    %v1236 = vand.u32 %v1235, 4294901760
    %1237 = vmatpush1.msra.mxu0 %v1236
    %1238 = vmatprep.subr.mxu0 0.0
    %v1239 = vand.u32 %v112, 4294901760
    %v1240 = vsub.f32 %v112, %v1239
    %v1241 = vand.u32 %v1240, 4294901760
    %v1242 = vsub.f32 %v1240, %v1241
    %v1243 = vand.u32 %v1242, 4294901760
    %1244 = vmatpush1.msra.mxu0 %v1243
    %1245 = vmatprep.subr.mxu0 0.0
    %v1246 = vand.u32 %v111, 4294901760
    %v1247 = vsub.f32 %v111, %v1246
    %v1248 = vand.u32 %v1247, 4294901760
    %v1249 = vsub.f32 %v1247, %v1248
    %v1250 = vand.u32 %v1249, 4294901760
    %1251 = vmatpush1.msra.mxu0 %v1250
    %1252 = vmatprep.subr.mxu0 0.0
    %v1253 = vand.u32 %v110, 4294901760
    %v1254 = vsub.f32 %v110, %v1253
    %v1255 = vand.u32 %v1254, 4294901760
    %v1256 = vsub.f32 %v1254, %v1255
    %v1257 = vand.u32 %v1256, 4294901760
    %1258 = vmatpush1.msra.mxu0 %v1257
    %1259 = vmatprep.subr.mxu0 0.0
    %v1260 = vand.u32 %v109, 4294901760
    %v1261 = vsub.f32 %v109, %v1260
    %v1262 = vand.u32 %v1261, 4294901760
    %v1263 = vsub.f32 %v1261, %v1262
    %v1264 = vand.u32 %v1263, 4294901760
    %1265 = vmatpush1.msra.mxu0 %v1264
    %1266 = vmatprep.subr.mxu0 0.0
    %v1267 = vand.u32 %v108, 4294901760
    %v1268 = vsub.f32 %v108, %v1267
    %v1269 = vand.u32 %v1268, 4294901760
    %v1270 = vsub.f32 %v1268, %v1269
    %v1271 = vand.u32 %v1270, 4294901760
    %1272 = vmatpush1.msra.mxu0 %v1271
    %1273 = vmatprep.subr.mxu0 0.0
    %v1274 = vand.u32 %v107, 4294901760
    %v1275 = vsub.f32 %v107, %v1274
    %v1276 = vand.u32 %v1275, 4294901760
    %v1277 = vsub.f32 %v1275, %v1276
    %v1278 = vand.u32 %v1277, 4294901760
    %1279 = vmatpush1.msra.mxu0 %v1278
    %1280 = vmatprep.subr.mxu0 0.0
    %v1281 = vand.u32 %v106, 4294901760
    %v1282 = vsub.f32 %v106, %v1281
    %v1283 = vand.u32 %v1282, 4294901760
    %v1284 = vsub.f32 %v1282, %v1283
    %v1285 = vand.u32 %v1284, 4294901760
    %1286 = vmatpush1.msra.mxu0 %v1285
    %1287 = vmatprep.subr.mxu0 0.0
    %v1288 = vand.u32 %v105, 4294901760
    %v1289 = vsub.f32 %v105, %v1288
    %v1290 = vand.u32 %v1289, 4294901760
    %v1291 = vsub.f32 %v1289, %v1290
    %v1292 = vand.u32 %v1291, 4294901760
    %1293 = vmatpush1.msra.mxu0 %v1292
    %1294 = vmatprep.subr.mxu0 0.0
    %v1295 = vand.u32 %v136, 4294901760
    %v1296 = vsub.f32 %v136, %v1295
    %v1297 = vand.u32 %v1296, 4294901760
    %v1298 = vsub.f32 %v1296, %v1297
    %v1299 = vand.u32 %v1298, 4294901760
    %1300 = vmatpush2.msra.mxu0 %v1299
    %1301 = vmatprep.subr.mxu0 0.0
    %v1302 = vand.u32 %v135, 4294901760
    %v1303 = vsub.f32 %v135, %v1302
    %v1304 = vand.u32 %v1303, 4294901760
    %v1305 = vsub.f32 %v1303, %v1304
    %v1306 = vand.u32 %v1305, 4294901760
    %1307 = vmatpush2.msra.mxu0 %v1306
    %1308 = vmatprep.subr.mxu0 0.0
    %v1309 = vand.u32 %v134, 4294901760
    %v1310 = vsub.f32 %v134, %v1309
    %v1311 = vand.u32 %v1310, 4294901760
    %v1312 = vsub.f32 %v1310, %v1311
    %v1313 = vand.u32 %v1312, 4294901760
    %1314 = vmatpush2.msra.mxu0 %v1313
    %1315 = vmatprep.subr.mxu0 0.0
    %v1316 = vand.u32 %v133, 4294901760
    %v1317 = vsub.f32 %v133, %v1316
    %v1318 = vand.u32 %v1317, 4294901760
    %v1319 = vsub.f32 %v1317, %v1318
    %v1320 = vand.u32 %v1319, 4294901760
    %1321 = vmatpush2.msra.mxu0 %v1320
    %1322 = vmatprep.subr.mxu0 0.0
    %v1323 = vand.u32 %v132, 4294901760
    %v1324 = vsub.f32 %v132, %v1323
    %v1325 = vand.u32 %v1324, 4294901760
    %v1326 = vsub.f32 %v1324, %v1325
    %v1327 = vand.u32 %v1326, 4294901760
    %1328 = vmatpush2.msra.mxu0 %v1327
    %1329 = vmatprep.subr.mxu0 0.0
    %v1330 = vand.u32 %v131, 4294901760
    %v1331 = vsub.f32 %v131, %v1330
    %v1332 = vand.u32 %v1331, 4294901760
    %v1333 = vsub.f32 %v1331, %v1332
    %v1334 = vand.u32 %v1333, 4294901760
    %1335 = vmatpush2.msra.mxu0 %v1334
    %1336 = vmatprep.subr.mxu0 0.0
    %v1337 = vand.u32 %v130, 4294901760
    %v1338 = vsub.f32 %v130, %v1337
    %v1339 = vand.u32 %v1338, 4294901760
    %v1340 = vsub.f32 %v1338, %v1339
    %v1341 = vand.u32 %v1340, 4294901760
    %1342 = vmatpush2.msra.mxu0 %v1341
    %1343 = vmatprep.subr.mxu0 0.0
    %v1344 = vand.u32 %v129, 4294901760
    %v1345 = vsub.f32 %v129, %v1344
    %v1346 = vand.u32 %v1345, 4294901760
    %v1347 = vsub.f32 %v1345, %v1346
    %v1348 = vand.u32 %v1347, 4294901760
    %1349 = vmatpush2.msra.mxu0 %v1348
    %1350 = vmatprep.subr.mxu0 0.0
    %v1351 = vand.u32 %v128, 4294901760
    %v1352 = vsub.f32 %v128, %v1351
    %v1353 = vand.u32 %v1352, 4294901760
    %v1354 = vsub.f32 %v1352, %v1353
    %v1355 = vand.u32 %v1354, 4294901760
    %1356 = vmatpush2.msra.mxu0 %v1355
    %1357 = vmatprep.subr.mxu0 0.0
    %v1358 = vand.u32 %v127, 4294901760
    %v1359 = vsub.f32 %v127, %v1358
    %v1360 = vand.u32 %v1359, 4294901760
    %v1361 = vsub.f32 %v1359, %v1360
    %v1362 = vand.u32 %v1361, 4294901760
    %1363 = vmatpush2.msra.mxu0 %v1362
    %1364 = vmatprep.subr.mxu0 0.0
    %v1365 = vand.u32 %v126, 4294901760
    %v1366 = vsub.f32 %v126, %v1365
    %v1367 = vand.u32 %v1366, 4294901760
    %v1368 = vsub.f32 %v1366, %v1367
    %v1369 = vand.u32 %v1368, 4294901760
    %1370 = vmatpush2.msra.mxu0 %v1369
    %1371 = vmatprep.subr.mxu0 0.0
    %v1372 = vand.u32 %v125, 4294901760
    %v1373 = vsub.f32 %v125, %v1372
    %v1374 = vand.u32 %v1373, 4294901760
    %v1375 = vsub.f32 %v1373, %v1374
    %v1376 = vand.u32 %v1375, 4294901760
    %1377 = vmatpush2.msra.mxu0 %v1376
    %1378 = vmatprep.subr.mxu0 0.0
    %v1379 = vand.u32 %v124, 4294901760
    %v1380 = vsub.f32 %v124, %v1379
    %v1381 = vand.u32 %v1380, 4294901760
    %v1382 = vsub.f32 %v1380, %v1381
    %v1383 = vand.u32 %v1382, 4294901760
    %1384 = vmatpush2.msra.mxu0 %v1383
    %1385 = vmatprep.subr.mxu0 0.0
    %v1386 = vand.u32 %v123, 4294901760
    %v1387 = vsub.f32 %v123, %v1386
    %v1388 = vand.u32 %v1387, 4294901760
    %v1389 = vsub.f32 %v1387, %v1388
    %v1390 = vand.u32 %v1389, 4294901760
    %1391 = vmatpush2.msra.mxu0 %v1390
    %1392 = vmatprep.subr.mxu0 0.0
    %v1393 = vand.u32 %v122, 4294901760
    %v1394 = vsub.f32 %v122, %v1393
    %v1395 = vand.u32 %v1394, 4294901760
    %v1396 = vsub.f32 %v1394, %v1395
    %v1397 = vand.u32 %v1396, 4294901760
    %1398 = vmatpush2.msra.mxu0 %v1397
    %1399 = vmatprep.subr.mxu0 0.0
    %v1400 = vand.u32 %v121, 4294901760
    %v1401 = vsub.f32 %v121, %v1400
    %v1402 = vand.u32 %v1401, 4294901760
    %v1403 = vsub.f32 %v1401, %v1402
    %v1404 = vand.u32 %v1403, 4294901760
    %1405 = vmatpush2.msra.mxu0 %v1404
    %v1406 = vand.u32 %v46, 4294901760
    %1407 = vmatprep.mubr.f32.mxu0 %v1406
    %v1408 = vand.u32 %v45, 4294901760
    %1409 = vmatmul.mubr.f32.gmra.mxu0 %v1408
    %v1410 = vpop.f32.mrf.mxu0
    %v1411 = vadd.f32 %v1164, %v1410
    %v1412 = vpop.f32.mrf.mxu0
    %v1413 = vand.u32 %v50, 4294901760
    %1414 = vmatprep.mubr.f32.mxu0 %v1413
    %v1415 = vand.u32 %v49, 4294901760
    %1416 = vmatmul.mubr.f32.gmra.mxu0 %v1415
    %v1417 = vpop.f32.mrf.mxu0
    %v1418 = vadd.f32 %v1179, %v1417
    %v1419 = vpop.f32.mrf.mxu0
    %1420 = vdwg.mxu0
    %1421 = vmatprep.subr.mxu0 0.0
    %v1422 = vand.u32 %v120, 4294901760
    %v1423 = vsub.f32 %v120, %v1422
    %1424 = vmatpush1.msra.mxu0 %v1423
    %1425 = vmatprep.subr.mxu0 0.0
    %v1426 = vand.u32 %v119, 4294901760
    %v1427 = vsub.f32 %v119, %v1426
    %1428 = vmatpush1.msra.mxu0 %v1427
    %1429 = vmatprep.subr.mxu0 0.0
    %v1430 = vand.u32 %v118, 4294901760
    %v1431 = vsub.f32 %v118, %v1430
    %1432 = vmatpush1.msra.mxu0 %v1431
    %1433 = vmatprep.subr.mxu0 0.0
    %v1434 = vand.u32 %v117, 4294901760
    %v1435 = vsub.f32 %v117, %v1434
    %1436 = vmatpush1.msra.mxu0 %v1435
    %1437 = vmatprep.subr.mxu0 0.0
    %v1438 = vand.u32 %v116, 4294901760
    %v1439 = vsub.f32 %v116, %v1438
    %1440 = vmatpush1.msra.mxu0 %v1439
    %1441 = vmatprep.subr.mxu0 0.0
    %v1442 = vand.u32 %v115, 4294901760
    %v1443 = vsub.f32 %v115, %v1442
    %1444 = vmatpush1.msra.mxu0 %v1443
    %1445 = vmatprep.subr.mxu0 0.0
    %v1446 = vand.u32 %v114, 4294901760
    %v1447 = vsub.f32 %v114, %v1446
    %1448 = vmatpush1.msra.mxu0 %v1447
    %1449 = vmatprep.subr.mxu0 0.0
    %v1450 = vand.u32 %v113, 4294901760
    %v1451 = vsub.f32 %v113, %v1450
    %1452 = vmatpush1.msra.mxu0 %v1451
    %1453 = vmatprep.subr.mxu0 0.0
    %v1454 = vand.u32 %v112, 4294901760
    %v1455 = vsub.f32 %v112, %v1454
    %1456 = vmatpush1.msra.mxu0 %v1455
    %1457 = vmatprep.subr.mxu0 0.0
    %v1458 = vand.u32 %v111, 4294901760
    %v1459 = vsub.f32 %v111, %v1458
    %1460 = vmatpush1.msra.mxu0 %v1459
    %1461 = vmatprep.subr.mxu0 0.0
    %v1462 = vand.u32 %v110, 4294901760
    %v1463 = vsub.f32 %v110, %v1462
    %1464 = vmatpush1.msra.mxu0 %v1463
    %1465 = vmatprep.subr.mxu0 0.0
    %v1466 = vand.u32 %v109, 4294901760
    %v1467 = vsub.f32 %v109, %v1466
    %1468 = vmatpush1.msra.mxu0 %v1467
    %1469 = vmatprep.subr.mxu0 0.0
    %v1470 = vand.u32 %v108, 4294901760
    %v1471 = vsub.f32 %v108, %v1470
    %1472 = vmatpush1.msra.mxu0 %v1471
    %1473 = vmatprep.subr.mxu0 0.0
    %v1474 = vand.u32 %v107, 4294901760
    %v1475 = vsub.f32 %v107, %v1474
    %1476 = vmatpush1.msra.mxu0 %v1475
    %1477 = vmatprep.subr.mxu0 0.0
    %v1478 = vand.u32 %v106, 4294901760
    %v1479 = vsub.f32 %v106, %v1478
    %1480 = vmatpush1.msra.mxu0 %v1479
    %1481 = vmatprep.subr.mxu0 0.0
    %v1482 = vand.u32 %v105, 4294901760
    %v1483 = vsub.f32 %v105, %v1482
    %1484 = vmatpush1.msra.mxu0 %v1483
    %1485 = vmatprep.subr.mxu0 0.0
    %v1486 = vand.u32 %v136, 4294901760
    %v1487 = vsub.f32 %v136, %v1486
    %1488 = vmatpush2.msra.mxu0 %v1487
    %1489 = vmatprep.subr.mxu0 0.0
    %v1490 = vand.u32 %v135, 4294901760
    %v1491 = vsub.f32 %v135, %v1490
    %1492 = vmatpush2.msra.mxu0 %v1491
    %1493 = vmatprep.subr.mxu0 0.0
    %v1494 = vand.u32 %v134, 4294901760
    %v1495 = vsub.f32 %v134, %v1494
    %1496 = vmatpush2.msra.mxu0 %v1495
    %1497 = vmatprep.subr.mxu0 0.0
    %v1498 = vand.u32 %v133, 4294901760
    %v1499 = vsub.f32 %v133, %v1498
    %1500 = vmatpush2.msra.mxu0 %v1499
    %1501 = vmatprep.subr.mxu0 0.0
    %v1502 = vand.u32 %v132, 4294901760
    %v1503 = vsub.f32 %v132, %v1502
    %1504 = vmatpush2.msra.mxu0 %v1503
    %1505 = vmatprep.subr.mxu0 0.0
    %v1506 = vand.u32 %v131, 4294901760
    %v1507 = vsub.f32 %v131, %v1506
    %1508 = vmatpush2.msra.mxu0 %v1507
    %1509 = vmatprep.subr.mxu0 0.0
    %v1510 = vand.u32 %v130, 4294901760
    %v1511 = vsub.f32 %v130, %v1510
    %1512 = vmatpush2.msra.mxu0 %v1511
    %1513 = vmatprep.subr.mxu0 0.0
    %v1514 = vand.u32 %v129, 4294901760
    %v1515 = vsub.f32 %v129, %v1514
    %1516 = vmatpush2.msra.mxu0 %v1515
    %1517 = vmatprep.subr.mxu0 0.0
    %v1518 = vand.u32 %v128, 4294901760
    %v1519 = vsub.f32 %v128, %v1518
    %1520 = vmatpush2.msra.mxu0 %v1519
    %1521 = vmatprep.subr.mxu0 0.0
    %v1522 = vand.u32 %v127, 4294901760
    %v1523 = vsub.f32 %v127, %v1522
    %1524 = vmatpush2.msra.mxu0 %v1523
    %1525 = vmatprep.subr.mxu0 0.0
    %v1526 = vand.u32 %v126, 4294901760
    %v1527 = vsub.f32 %v126, %v1526
    %1528 = vmatpush2.msra.mxu0 %v1527
    %1529 = vmatprep.subr.mxu0 0.0
    %v1530 = vand.u32 %v125, 4294901760
    %v1531 = vsub.f32 %v125, %v1530
    %1532 = vmatpush2.msra.mxu0 %v1531
    %1533 = vmatprep.subr.mxu0 0.0
    %v1534 = vand.u32 %v124, 4294901760
    %v1535 = vsub.f32 %v124, %v1534
    %1536 = vmatpush2.msra.mxu0 %v1535
    %1537 = vmatprep.subr.mxu0 0.0
    %v1538 = vand.u32 %v123, 4294901760
    %v1539 = vsub.f32 %v123, %v1538
    %1540 = vmatpush2.msra.mxu0 %v1539
    %1541 = vmatprep.subr.mxu0 0.0
    %v1542 = vand.u32 %v122, 4294901760
    %v1543 = vsub.f32 %v122, %v1542
    %1544 = vmatpush2.msra.mxu0 %v1543
    %1545 = vmatprep.subr.mxu0 0.0
    %v1546 = vand.u32 %v121, 4294901760
    %v1547 = vsub.f32 %v121, %v1546
    %1548 = vmatpush2.msra.mxu0 %v1547
    %v1549 = vand.u32 %v46, 4294901760
    %v1550 = vsub.f32 %v46, %v1549
    %1551 = vmatprep.mubr.f32.mxu0 %v1550
    %v1552 = vand.u32 %v45, 4294901760
    %v1553 = vsub.f32 %v45, %v1552
    %1554 = vmatmul.mubr.f32.gmra.mxu0 %v1553
    %v1555 = vpop.f32.mrf.mxu0
    %v1556 = vadd.f32 %v1411, %v1555
    %v1557 = vpop.f32.mrf.mxu0
    %v1558 = vand.u32 %v50, 4294901760
    %v1559 = vsub.f32 %v50, %v1558
    %1560 = vmatprep.mubr.f32.mxu0 %v1559
    %v1561 = vand.u32 %v49, 4294901760
    %v1562 = vsub.f32 %v49, %v1561
    %1563 = vmatmul.mubr.f32.gmra.mxu0 %v1562
    %v1564 = vpop.f32.mrf.mxu0
    %v1565 = vadd.f32 %v1418, %v1564
    %v1566 = vpop.f32.mrf.mxu0
    %1567 = vdwg.mxu0
    %1568 = vmatprep.subr.mxu0 0.0
    %v1569 = vand.u32 %v120, 4294901760
    %1570 = vmatpush1.msra.mxu0 %v1569
    %1571 = vmatprep.subr.mxu0 0.0
    %v1572 = vand.u32 %v119, 4294901760
    %1573 = vmatpush1.msra.mxu0 %v1572
    %1574 = vmatprep.subr.mxu0 0.0
    %v1575 = vand.u32 %v118, 4294901760
    %1576 = vmatpush1.msra.mxu0 %v1575
    %1577 = vmatprep.subr.mxu0 0.0
    %v1578 = vand.u32 %v117, 4294901760
    %1579 = vmatpush1.msra.mxu0 %v1578
    %1580 = vmatprep.subr.mxu0 0.0
    %v1581 = vand.u32 %v116, 4294901760
    %1582 = vmatpush1.msra.mxu0 %v1581
    %1583 = vmatprep.subr.mxu0 0.0
    %v1584 = vand.u32 %v115, 4294901760
    %1585 = vmatpush1.msra.mxu0 %v1584
    %1586 = vmatprep.subr.mxu0 0.0
    %v1587 = vand.u32 %v114, 4294901760
    %1588 = vmatpush1.msra.mxu0 %v1587
    %1589 = vmatprep.subr.mxu0 0.0
    %v1590 = vand.u32 %v113, 4294901760
    %1591 = vmatpush1.msra.mxu0 %v1590
    %1592 = vmatprep.subr.mxu0 0.0
    %v1593 = vand.u32 %v112, 4294901760
    %1594 = vmatpush1.msra.mxu0 %v1593
    %1595 = vmatprep.subr.mxu0 0.0
    %v1596 = vand.u32 %v111, 4294901760
    %1597 = vmatpush1.msra.mxu0 %v1596
    %1598 = vmatprep.subr.mxu0 0.0
    %v1599 = vand.u32 %v110, 4294901760
    %1600 = vmatpush1.msra.mxu0 %v1599
    %1601 = vmatprep.subr.mxu0 0.0
    %v1602 = vand.u32 %v109, 4294901760
    %1603 = vmatpush1.msra.mxu0 %v1602
    %1604 = vmatprep.subr.mxu0 0.0
    %v1605 = vand.u32 %v108, 4294901760
    %1606 = vmatpush1.msra.mxu0 %v1605
    %1607 = vmatprep.subr.mxu0 0.0
    %v1608 = vand.u32 %v107, 4294901760
    %1609 = vmatpush1.msra.mxu0 %v1608
    %1610 = vmatprep.subr.mxu0 0.0
    %v1611 = vand.u32 %v106, 4294901760
    %1612 = vmatpush1.msra.mxu0 %v1611
    %1613 = vmatprep.subr.mxu0 0.0
    %v1614 = vand.u32 %v105, 4294901760
    %1615 = vmatpush1.msra.mxu0 %v1614
    %1616 = vmatprep.subr.mxu0 0.0
    %v1617 = vand.u32 %v136, 4294901760
    %1618 = vmatpush2.msra.mxu0 %v1617
    %1619 = vmatprep.subr.mxu0 0.0
    %v1620 = vand.u32 %v135, 4294901760
    %1621 = vmatpush2.msra.mxu0 %v1620
    %1622 = vmatprep.subr.mxu0 0.0
    %v1623 = vand.u32 %v134, 4294901760
    %1624 = vmatpush2.msra.mxu0 %v1623
    %1625 = vmatprep.subr.mxu0 0.0
    %v1626 = vand.u32 %v133, 4294901760
    %1627 = vmatpush2.msra.mxu0 %v1626
    %1628 = vmatprep.subr.mxu0 0.0
    %v1629 = vand.u32 %v132, 4294901760
    %1630 = vmatpush2.msra.mxu0 %v1629
    %1631 = vmatprep.subr.mxu0 0.0
    %v1632 = vand.u32 %v131, 4294901760
    %1633 = vmatpush2.msra.mxu0 %v1632
    %1634 = vmatprep.subr.mxu0 0.0
    %v1635 = vand.u32 %v130, 4294901760
    %1636 = vmatpush2.msra.mxu0 %v1635
    %1637 = vmatprep.subr.mxu0 0.0
    %v1638 = vand.u32 %v129, 4294901760
    %1639 = vmatpush2.msra.mxu0 %v1638
    %1640 = vmatprep.subr.mxu0 0.0
    %v1641 = vand.u32 %v128, 4294901760
    %1642 = vmatpush2.msra.mxu0 %v1641
    %1643 = vmatprep.subr.mxu0 0.0
    %v1644 = vand.u32 %v127, 4294901760
    %1645 = vmatpush2.msra.mxu0 %v1644
    %1646 = vmatprep.subr.mxu0 0.0
    %v1647 = vand.u32 %v126, 4294901760
    %1648 = vmatpush2.msra.mxu0 %v1647
    %1649 = vmatprep.subr.mxu0 0.0
    %v1650 = vand.u32 %v125, 4294901760
    %1651 = vmatpush2.msra.mxu0 %v1650
    %1652 = vmatprep.subr.mxu0 0.0
    %v1653 = vand.u32 %v124, 4294901760
    %1654 = vmatpush2.msra.mxu0 %v1653
    %1655 = vmatprep.subr.mxu0 0.0
    %v1656 = vand.u32 %v123, 4294901760
    %1657 = vmatpush2.msra.mxu0 %v1656
    %1658 = vmatprep.subr.mxu0 0.0
    %v1659 = vand.u32 %v122, 4294901760
    %1660 = vmatpush2.msra.mxu0 %v1659
    %1661 = vmatprep.subr.mxu0 0.0
    %v1662 = vand.u32 %v121, 4294901760
    %1663 = vmatpush2.msra.mxu0 %v1662
    %v1664 = vand.u32 %v46, 4294901760
    %v1665 = vsub.f32 %v46, %v1664
    %v1666 = vand.u32 %v1665, 4294901760
    %1667 = vmatprep.mubr.f32.mxu0 %v1666
    %v1668 = vand.u32 %v45, 4294901760
    %v1669 = vsub.f32 %v45, %v1668
    %v1670 = vand.u32 %v1669, 4294901760
    %1671 = vmatmul.mubr.f32.gmra.mxu0 %v1670
    %v1672 = vpop.f32.mrf.mxu0
    %v1673 = vadd.f32 %v1556, %v1672
    %v1674 = vpop.f32.mrf.mxu0
    %v1675 = vand.u32 %v50, 4294901760
    %v1676 = vsub.f32 %v50, %v1675
    %v1677 = vand.u32 %v1676, 4294901760
    %1678 = vmatprep.mubr.f32.mxu0 %v1677
    %v1679 = vand.u32 %v49, 4294901760
    %v1680 = vsub.f32 %v49, %v1679
    %v1681 = vand.u32 %v1680, 4294901760
    %1682 = vmatmul.mubr.f32.gmra.mxu0 %v1681
    %v1683 = vpop.f32.mrf.mxu0
    %v1684 = vadd.f32 %v1565, %v1683
    %v1685 = vpop.f32.mrf.mxu0
    %1686 = vdwg.mxu0
    %1687 = vmatprep.subr.mxu0 0.0
    %v1688 = vand.u32 %v120, 4294901760
    %v1689 = vsub.f32 %v120, %v1688
    %v1690 = vand.u32 %v1689, 4294901760
    %1691 = vmatpush1.msra.mxu0 %v1690
    %1692 = vmatprep.subr.mxu0 0.0
    %v1693 = vand.u32 %v119, 4294901760
    %v1694 = vsub.f32 %v119, %v1693
    %v1695 = vand.u32 %v1694, 4294901760
    %1696 = vmatpush1.msra.mxu0 %v1695
    %1697 = vmatprep.subr.mxu0 0.0
    %v1698 = vand.u32 %v118, 4294901760
    %v1699 = vsub.f32 %v118, %v1698
    %v1700 = vand.u32 %v1699, 4294901760
    %1701 = vmatpush1.msra.mxu0 %v1700
    %1702 = vmatprep.subr.mxu0 0.0
    %v1703 = vand.u32 %v117, 4294901760
    %v1704 = vsub.f32 %v117, %v1703
    %v1705 = vand.u32 %v1704, 4294901760
    %1706 = vmatpush1.msra.mxu0 %v1705
    %1707 = vmatprep.subr.mxu0 0.0
    %v1708 = vand.u32 %v116, 4294901760
    %v1709 = vsub.f32 %v116, %v1708
    %v1710 = vand.u32 %v1709, 4294901760
    %1711 = vmatpush1.msra.mxu0 %v1710
    %1712 = vmatprep.subr.mxu0 0.0
    %v1713 = vand.u32 %v115, 4294901760
    %v1714 = vsub.f32 %v115, %v1713
    %v1715 = vand.u32 %v1714, 4294901760
    %1716 = vmatpush1.msra.mxu0 %v1715
    %1717 = vmatprep.subr.mxu0 0.0
    %v1718 = vand.u32 %v114, 4294901760
    %v1719 = vsub.f32 %v114, %v1718
    %v1720 = vand.u32 %v1719, 4294901760
    %1721 = vmatpush1.msra.mxu0 %v1720
    %1722 = vmatprep.subr.mxu0 0.0
    %v1723 = vand.u32 %v113, 4294901760
    %v1724 = vsub.f32 %v113, %v1723
    %v1725 = vand.u32 %v1724, 4294901760
    %1726 = vmatpush1.msra.mxu0 %v1725
    %1727 = vmatprep.subr.mxu0 0.0
    %v1728 = vand.u32 %v112, 4294901760
    %v1729 = vsub.f32 %v112, %v1728
    %v1730 = vand.u32 %v1729, 4294901760
    %1731 = vmatpush1.msra.mxu0 %v1730
    %1732 = vmatprep.subr.mxu0 0.0
    %v1733 = vand.u32 %v111, 4294901760
    %v1734 = vsub.f32 %v111, %v1733
    %v1735 = vand.u32 %v1734, 4294901760
    %1736 = vmatpush1.msra.mxu0 %v1735
    %1737 = vmatprep.subr.mxu0 0.0
    %v1738 = vand.u32 %v110, 4294901760
    %v1739 = vsub.f32 %v110, %v1738
    %v1740 = vand.u32 %v1739, 4294901760
    %1741 = vmatpush1.msra.mxu0 %v1740
    %1742 = vmatprep.subr.mxu0 0.0
    %v1743 = vand.u32 %v109, 4294901760
    %v1744 = vsub.f32 %v109, %v1743
    %v1745 = vand.u32 %v1744, 4294901760
    %1746 = vmatpush1.msra.mxu0 %v1745
    %1747 = vmatprep.subr.mxu0 0.0
    %v1748 = vand.u32 %v108, 4294901760
    %v1749 = vsub.f32 %v108, %v1748
    %v1750 = vand.u32 %v1749, 4294901760
    %1751 = vmatpush1.msra.mxu0 %v1750
    %1752 = vmatprep.subr.mxu0 0.0
    %v1753 = vand.u32 %v107, 4294901760
    %v1754 = vsub.f32 %v107, %v1753
    %v1755 = vand.u32 %v1754, 4294901760
    %1756 = vmatpush1.msra.mxu0 %v1755
    %1757 = vmatprep.subr.mxu0 0.0
    %v1758 = vand.u32 %v106, 4294901760
    %v1759 = vsub.f32 %v106, %v1758
    %v1760 = vand.u32 %v1759, 4294901760
    %1761 = vmatpush1.msra.mxu0 %v1760
    %1762 = vmatprep.subr.mxu0 0.0
    %v1763 = vand.u32 %v105, 4294901760
    %v1764 = vsub.f32 %v105, %v1763
    %v1765 = vand.u32 %v1764, 4294901760
    %1766 = vmatpush1.msra.mxu0 %v1765
    %1767 = vmatprep.subr.mxu0 0.0
    %v1768 = vand.u32 %v136, 4294901760
    %v1769 = vsub.f32 %v136, %v1768
    %v1770 = vand.u32 %v1769, 4294901760
    %1771 = vmatpush2.msra.mxu0 %v1770
    %1772 = vmatprep.subr.mxu0 0.0
    %v1773 = vand.u32 %v135, 4294901760
    %v1774 = vsub.f32 %v135, %v1773
    %v1775 = vand.u32 %v1774, 4294901760
    %1776 = vmatpush2.msra.mxu0 %v1775
    %1777 = vmatprep.subr.mxu0 0.0
    %v1778 = vand.u32 %v134, 4294901760
    %v1779 = vsub.f32 %v134, %v1778
    %v1780 = vand.u32 %v1779, 4294901760
    %1781 = vmatpush2.msra.mxu0 %v1780
    %1782 = vmatprep.subr.mxu0 0.0
    %v1783 = vand.u32 %v133, 4294901760
    %v1784 = vsub.f32 %v133, %v1783
    %v1785 = vand.u32 %v1784, 4294901760
    %1786 = vmatpush2.msra.mxu0 %v1785
    %1787 = vmatprep.subr.mxu0 0.0
    %v1788 = vand.u32 %v132, 4294901760
    %v1789 = vsub.f32 %v132, %v1788
    %v1790 = vand.u32 %v1789, 4294901760
    %1791 = vmatpush2.msra.mxu0 %v1790
    %1792 = vmatprep.subr.mxu0 0.0
    %v1793 = vand.u32 %v131, 4294901760
    %v1794 = vsub.f32 %v131, %v1793
    %v1795 = vand.u32 %v1794, 4294901760
    %1796 = vmatpush2.msra.mxu0 %v1795
    %1797 = vmatprep.subr.mxu0 0.0
    %v1798 = vand.u32 %v130, 4294901760
    %v1799 = vsub.f32 %v130, %v1798
    %v1800 = vand.u32 %v1799, 4294901760
    %1801 = vmatpush2.msra.mxu0 %v1800
    %1802 = vmatprep.subr.mxu0 0.0
    %v1803 = vand.u32 %v129, 4294901760
    %v1804 = vsub.f32 %v129, %v1803
    %v1805 = vand.u32 %v1804, 4294901760
    %1806 = vmatpush2.msra.mxu0 %v1805
    %1807 = vmatprep.subr.mxu0 0.0
    %v1808 = vand.u32 %v128, 4294901760
    %v1809 = vsub.f32 %v128, %v1808
    %v1810 = vand.u32 %v1809, 4294901760
    %1811 = vmatpush2.msra.mxu0 %v1810
    %1812 = vmatprep.subr.mxu0 0.0
    %v1813 = vand.u32 %v127, 4294901760
    %v1814 = vsub.f32 %v127, %v1813
    %v1815 = vand.u32 %v1814, 4294901760
    %1816 = vmatpush2.msra.mxu0 %v1815
    %1817 = vmatprep.subr.mxu0 0.0
    %v1818 = vand.u32 %v126, 4294901760
    %v1819 = vsub.f32 %v126, %v1818
    %v1820 = vand.u32 %v1819, 4294901760
    %1821 = vmatpush2.msra.mxu0 %v1820
    %1822 = vmatprep.subr.mxu0 0.0
    %v1823 = vand.u32 %v125, 4294901760
    %v1824 = vsub.f32 %v125, %v1823
    %v1825 = vand.u32 %v1824, 4294901760
    %1826 = vmatpush2.msra.mxu0 %v1825
    %1827 = vmatprep.subr.mxu0 0.0
    %v1828 = vand.u32 %v124, 4294901760
    %v1829 = vsub.f32 %v124, %v1828
    %v1830 = vand.u32 %v1829, 4294901760
    %1831 = vmatpush2.msra.mxu0 %v1830
    %1832 = vmatprep.subr.mxu0 0.0
    %v1833 = vand.u32 %v123, 4294901760
    %v1834 = vsub.f32 %v123, %v1833
    %v1835 = vand.u32 %v1834, 4294901760
    %1836 = vmatpush2.msra.mxu0 %v1835
    %1837 = vmatprep.subr.mxu0 0.0
    %v1838 = vand.u32 %v122, 4294901760
    %v1839 = vsub.f32 %v122, %v1838
    %v1840 = vand.u32 %v1839, 4294901760
    %1841 = vmatpush2.msra.mxu0 %v1840
    %1842 = vmatprep.subr.mxu0 0.0
    %v1843 = vand.u32 %v121, 4294901760
    %v1844 = vsub.f32 %v121, %v1843
    %v1845 = vand.u32 %v1844, 4294901760
    %1846 = vmatpush2.msra.mxu0 %v1845
    %v1847 = vand.u32 %v46, 4294901760
    %1848 = vmatprep.mubr.f32.mxu0 %v1847
    %v1849 = vand.u32 %v45, 4294901760
    %1850 = vmatmul.mubr.f32.gmra.mxu0 %v1849
    %v1851 = vpop.f32.mrf.mxu0
    %v1852 = vadd.f32 %v1673, %v1851
    %v1853 = vpop.f32.mrf.mxu0
    %v1854 = vand.u32 %v50, 4294901760
    %1855 = vmatprep.mubr.f32.mxu0 %v1854
    %v1856 = vand.u32 %v49, 4294901760
    %1857 = vmatmul.mubr.f32.gmra.mxu0 %v1856
    %v1858 = vpop.f32.mrf.mxu0
    %v1859 = vadd.f32 %v1684, %v1858
    %v1860 = vpop.f32.mrf.mxu0
    %1861 = vdwg.mxu0
    %1862 = vmatprep.subr.mxu0 0.0
    %v1863 = vand.u32 %v120, 4294901760
    %1864 = vmatpush1.msra.mxu0 %v1863
    %1865 = vmatprep.subr.mxu0 0.0
    %v1866 = vand.u32 %v119, 4294901760
    %1867 = vmatpush1.msra.mxu0 %v1866
    %1868 = vmatprep.subr.mxu0 0.0
    %v1869 = vand.u32 %v118, 4294901760
    %1870 = vmatpush1.msra.mxu0 %v1869
    %1871 = vmatprep.subr.mxu0 0.0
    %v1872 = vand.u32 %v117, 4294901760
    %1873 = vmatpush1.msra.mxu0 %v1872
    %1874 = vmatprep.subr.mxu0 0.0
    %v1875 = vand.u32 %v116, 4294901760
    %1876 = vmatpush1.msra.mxu0 %v1875
    %1877 = vmatprep.subr.mxu0 0.0
    %v1878 = vand.u32 %v115, 4294901760
    %1879 = vmatpush1.msra.mxu0 %v1878
    %1880 = vmatprep.subr.mxu0 0.0
    %v1881 = vand.u32 %v114, 4294901760
    %1882 = vmatpush1.msra.mxu0 %v1881
    %1883 = vmatprep.subr.mxu0 0.0
    %v1884 = vand.u32 %v113, 4294901760
    %1885 = vmatpush1.msra.mxu0 %v1884
    %1886 = vmatprep.subr.mxu0 0.0
    %v1887 = vand.u32 %v112, 4294901760
    %1888 = vmatpush1.msra.mxu0 %v1887
    %1889 = vmatprep.subr.mxu0 0.0
    %v1890 = vand.u32 %v111, 4294901760
    %1891 = vmatpush1.msra.mxu0 %v1890
    %1892 = vmatprep.subr.mxu0 0.0
    %v1893 = vand.u32 %v110, 4294901760
    %1894 = vmatpush1.msra.mxu0 %v1893
    %1895 = vmatprep.subr.mxu0 0.0
    %v1896 = vand.u32 %v109, 4294901760
    %1897 = vmatpush1.msra.mxu0 %v1896
    %1898 = vmatprep.subr.mxu0 0.0
    %v1899 = vand.u32 %v108, 4294901760
    %1900 = vmatpush1.msra.mxu0 %v1899
    %1901 = vmatprep.subr.mxu0 0.0
    %v1902 = vand.u32 %v107, 4294901760
    %1903 = vmatpush1.msra.mxu0 %v1902
    %1904 = vmatprep.subr.mxu0 0.0
    %v1905 = vand.u32 %v106, 4294901760
    %1906 = vmatpush1.msra.mxu0 %v1905
    %1907 = vmatprep.subr.mxu0 0.0
    %v1908 = vand.u32 %v105, 4294901760
    %1909 = vmatpush1.msra.mxu0 %v1908
    %1910 = vmatprep.subr.mxu0 0.0
    %v1911 = vand.u32 %v136, 4294901760
    %1912 = vmatpush2.msra.mxu0 %v1911
    %1913 = vmatprep.subr.mxu0 0.0
    %v1914 = vand.u32 %v135, 4294901760
    %1915 = vmatpush2.msra.mxu0 %v1914
    %1916 = vmatprep.subr.mxu0 0.0
    %v1917 = vand.u32 %v134, 4294901760
    %1918 = vmatpush2.msra.mxu0 %v1917
    %1919 = vmatprep.subr.mxu0 0.0
    %v1920 = vand.u32 %v133, 4294901760
    %1921 = vmatpush2.msra.mxu0 %v1920
    %1922 = vmatprep.subr.mxu0 0.0
    %v1923 = vand.u32 %v132, 4294901760
    %1924 = vmatpush2.msra.mxu0 %v1923
    %1925 = vmatprep.subr.mxu0 0.0
    %v1926 = vand.u32 %v131, 4294901760
    %1927 = vmatpush2.msra.mxu0 %v1926
    %1928 = vmatprep.subr.mxu0 0.0
    %v1929 = vand.u32 %v130, 4294901760
    %1930 = vmatpush2.msra.mxu0 %v1929
    %1931 = vmatprep.subr.mxu0 0.0
    %v1932 = vand.u32 %v129, 4294901760
    %1933 = vmatpush2.msra.mxu0 %v1932
    %1934 = vmatprep.subr.mxu0 0.0
    %v1935 = vand.u32 %v128, 4294901760
    %1936 = vmatpush2.msra.mxu0 %v1935
    %1937 = vmatprep.subr.mxu0 0.0
    %v1938 = vand.u32 %v127, 4294901760
    %1939 = vmatpush2.msra.mxu0 %v1938
    %1940 = vmatprep.subr.mxu0 0.0
    %v1941 = vand.u32 %v126, 4294901760
    %1942 = vmatpush2.msra.mxu0 %v1941
    %1943 = vmatprep.subr.mxu0 0.0
    %v1944 = vand.u32 %v125, 4294901760
    %1945 = vmatpush2.msra.mxu0 %v1944
    %1946 = vmatprep.subr.mxu0 0.0
    %v1947 = vand.u32 %v124, 4294901760
    %1948 = vmatpush2.msra.mxu0 %v1947
    %1949 = vmatprep.subr.mxu0 0.0
    %v1950 = vand.u32 %v123, 4294901760
    %1951 = vmatpush2.msra.mxu0 %v1950
    %1952 = vmatprep.subr.mxu0 0.0
    %v1953 = vand.u32 %v122, 4294901760
    %1954 = vmatpush2.msra.mxu0 %v1953
    %1955 = vmatprep.subr.mxu0 0.0
    %v1956 = vand.u32 %v121, 4294901760
    %1957 = vmatpush2.msra.mxu0 %v1956
    %v1958 = vand.u32 %v46, 4294901760
    %1959 = vmatprep.mubr.f32.mxu0 %v1958
    %v1960 = vand.u32 %v45, 4294901760
    %1961 = vmatmul.mubr.f32.gmra.mxu0 %v1960
    %v1962 = vpop.f32.mrf.mxu0
    %v1963 = vadd.f32 %v1852, %v1962
    %v1964 = vpop.f32.mrf.mxu0
    %v1965 = vand.u32 %v50, 4294901760
    %1966 = vmatprep.mubr.f32.mxu0 %v1965
    %v1967 = vand.u32 %v49, 4294901760
    %1968 = vmatmul.mubr.f32.gmra.mxu0 %v1967
    %v1969 = vpop.f32.mrf.mxu0
    %v1970 = vadd.f32 %v1859, %v1969
    %v1971 = vpop.f32.mrf.mxu0
    %1972 = vdwg.mxu0
    %v1973 = vmul.f32 %v1963, %v71
    %v1974 = vmul.f32 %v1970, %v72
    %v1975 = vld [vmem:[%s2] sm:$0x1]
    %v1977 = vlaneseq
    %v1978 = vshrl.u32 %v1977, 7
    %v1979 = vsub.s32 0, %v1978
    %v1980 = vrot.slane %v1975, %v1979
    %v1982 = vadd.f32 %v1973, %v1980
    %v1983 = vadd.f32 %v1974, %v1980
    %1984 = vst [vmem:[#allocation7] sm:$0xff] %v1982
    %1985 = vst [vmem:[#allocation7 + $0x8] sm:$0xff] %v1983
    // Predicated region
    $region22: #{tpu_custom_call.1} parent=1 // pred_check
      _
    $region23: #{tpu_custom_call.1} parent=1 // pred_check_branch
      %1987 = sbr.rel (0) target = $region25
    $region24: #{tpu_custom_call.1} parent=1 // pred_region
      %s1989 = ssub.s32 256, 256
      %1990 = vsyncadd [#allocation4], %s1989
      %s1991 = sshll.u32 [#allocation7], 4
      %s1992 = int_to_ptr.vmem [resolvable:$true] %s1991
      %1997 = dma.vmem_to_hbm [thread:$0]  %s1992, 256, %s3, [#allocation4], 128, 128, 8
    $region25: #{tpu_custom_call.1} parent=1 // pred_fallthru
      _
    // Predicated region
    $region26: #{tpu_custom_call.1} parent=1 // pred_check
      _
    $region27: #{tpu_custom_call.1} parent=1 // pred_check_branch
      %1999 = sbr.rel (0) target = $region29
    $region28: #{tpu_custom_call.1} parent=1 // pred_region
      %2000 = dma.done [#allocation4], 256
    $region29: #{tpu_custom_call.1} parent=1 // pred_fallthru
      _
    %2001 = vsyncpa [#allocation3], 1
    %2002 = vsyncpa [#allocation6], 1
    %2003 = vsyncpa [#allocation4], 1

</llo_original>
